<compile_context>
chip_gen: v5e
topology: v5e:2x2
jax: 0.10.0
libtpu: 0.0.40
codegen_flags: <defaults>
</compile_context>

<pallas_src>
import jax
import jax.numpy as jnp
import numpy as np
from jax.experimental import pallas as pl
from jax.experimental.pallas import tpu as pltpu

# Problem sizes (C = 3 is forced by Conv1d(12, ...) since 12 = C + C*C).
B, N, C, K, INSIZE, H3 = 2, 32, 3, 16, 32, 32
BN = B * N
OUT_ROWS, OUT_LANES = 8, 128   # full-vreg output slab; [:B, :1] is the result
AB_LANES = 8                   # padded contraction width of the score matmul
BIG = 1e30                     # finite cross-batch sentinel (NOT inf)

# ---------------------------------------------------------------------------
# Static parameter-slab layout: each layer's weight gets a column band of the
# weight slab (rows 0:fan_in), each layer's bias gets one row of the bias slab.
# ---------------------------------------------------------------------------
_LAYER_NAMES = ("w1", "w2", "w4", "f1", "f2", "f3", "f4", "f5")
_LAYER_DIMS = {
    "w1": (C + C * C, H3),             # conv1: 12 -> 32   (+BN, ReLU)
    "w2": (H3, H3),                    # conv2: 32 -> 32   (+BN, ReLU)
    "w4": (H3, INSIZE),                # conv4: 32 -> 32   (+BN, ReLU)
    "f1": (INSIZE, INSIZE // 2),       # fc:    32 -> 16   (+BN, ReLU)
    "f2": (INSIZE // 2, INSIZE // 4),  # fc:    16 -> 8    (+BN, ReLU)
    "f3": (INSIZE // 4, INSIZE // 8),  # fc:    8  -> 4    (+BN, ReLU)
    "f4": (INSIZE // 8, 4),            # fc:    4  -> 4    (Tanh)
    "f5": (4, 1),                      # fc:    4  -> 1    (Sigmoid)
}
_W_COL = {}
_c = 0
for _n in _LAYER_NAMES:
    _W_COL[_n] = _c
    _c += _LAYER_DIMS[_n][1]
_B_ROW = {n: i for i, n in enumerate(_LAYER_NAMES)}


def _round_up(x, m):
    return ((x + m - 1) // m) * m


W_SLAB_SHAPE = (_round_up(max(fi for fi, _ in _LAYER_DIMS.values()), 8),
                _round_up(_c, 128))                                   # (32, 256)
B_SLAB_SHAPE = (_round_up(len(_LAYER_NAMES), 8),
                _round_up(max(fo for _, fo in _LAYER_DIMS.values()), 128))  # (8, 128)


# ---------------------------------------------------------------------------
# The fused kernel.
# ---------------------------------------------------------------------------
def _jarvis_kernel(amat_ref, btmat_ref, xquad_ref, wslab_ref, bslab_ref, out_ref):
    f32 = jnp.float32

    amat = amat_ref[...]                        # [BN, 8]  = [-2x | 1 | BIG*oh | 0]
    btmat = btmat_ref[...]                      # [BN, 8]  = [ x  | |x|^2 | 1-oh | 0]
    xq = xquad_ref[...]                         # [BN, 12] = [ x  | x_a*x_c ]
    x = xq[:, 0:C]                              # [BN, 3]

    # --- distance surrogate + cross-batch mask in ONE MXU pass.
    # scores[i,j] = -2 x_i.x_j + |x_j|^2 + BIG*[batch(i) != batch(j)]
    # (the per-row-constant |x_i|^2 term cannot change the per-row ranking.)
    scores = jax.lax.dot_general(amat, btmat, (((1,), (1,)), ((), ())),
                                 preferred_element_type=f32)            # [BN, BN]

    # --- make per-row scores bit-unique: clear the 6 low mantissa bits and OR
    # in the column index (<= 63 ULP perturbation, lowest-index tie-break).
    bits = pltpu.bitcast(scores, jnp.int32)
    col_id = jax.lax.broadcasted_iota(jnp.int32, (BN, BN), 1)
    keys = pltpu.bitcast((bits & jnp.int32(-64)) | col_id, f32)

    USED = jnp.float32(3.0e38)                  # finite "already taken" sentinel

    # --- K rounds, ONE cross-lane reduction each -> boolean membership matrix.
    def select_step(_, carry):
        sc, w = carry
        rowmin = jnp.min(sc, axis=-1, keepdims=True)    # [BN, 1]
        hit = sc == rowmin                              # exactly one True per row
        return jnp.where(hit, USED, sc), w | hit

    _, w_nn = jax.lax.fori_loop(
        0, K, select_step, (keys, jnp.zeros((BN, BN), jnp.bool_)), unroll=True)
    w_f = w_nn.astype(f32)

    # --- local covariance without a gather, first+second moments in ONE matmul:
    #   moments = W @ [x | x_a*x_c]  -> mean (cols 0:3, /K) and m2 (cols 3:12)
    #   cov_i[a,c] = m2_i[a,c] - K * mean_i[a] * mean_i[c]
    moments = jnp.dot(w_f, xq, preferred_element_type=f32)              # [BN, 12]
    mean = moments[:, 0:C] * (1.0 / K)                                   # [BN, 3]
    m2 = moments[:, C:C + C * C]                                         # [BN, 9]
    mm = jnp.concatenate([mean[:, a:a + 1] * mean for a in range(C)], axis=-1)
    feat = jnp.concatenate([x, m2 - float(K) * mm], axis=-1)             # [BN, 12]

    # --- 1x1-conv MLP + fc head; weights/biases sliced out of the packed slabs.
    def layer(v, name, act):
        fi, fo = _LAYER_DIMS[name]
        c0 = _W_COL[name]
        r = _B_ROW[name]
        y = jnp.dot(v, wslab_ref[0:fi, c0:c0 + fo],
                    preferred_element_type=f32) + bslab_ref[r:r + 1, 0:fo]
        return act(y)

    relu = lambda t: jnp.maximum(t, 0.0)
    h = layer(feat, "w1", relu)                                          # [BN, 32]
    h = layer(h, "w2", relu)                                             # [BN, 32]
    h = layer(h, "w4", relu)                                             # [BN, INSIZE]

    # torch.max(x, dim=-1)[0]: max over the points of each cloud, padded to a
    # full 8-sublane tile so downstream stores are unmasked.
    v = jnp.concatenate(
        [jnp.max(h[b * N:(b + 1) * N], axis=0, keepdims=True) for b in range(B)]
        + [jnp.zeros((OUT_ROWS - B, INSIZE), f32)], axis=0)              # [8, INSIZE]

    v = layer(v, "f1", relu)
    v = layer(v, "f2", relu)
    v = layer(v, "f3", relu)
    v = layer(v, "f4", jnp.tanh)
    v = layer(v, "f5", jax.nn.sigmoid)                                   # [8, 1]

    # Full-vreg, unmasked store; the wrapper slices [:B, :1].
    out_ref[...] = jnp.broadcast_to(v, (OUT_ROWS, OUT_LANES))


@jax.jit
def jarvis_forward(data, wslab, bslab):
    f32 = jnp.float32
    # Trivial layout work lives out here (plain XLA), not in the kernel.
    x = data.reshape(BN, C).astype(f32)                                  # [BN, 3]
    rowsq = jnp.sum(x * x, axis=1, keepdims=True)                        # [BN, 1]
    onehot = jnp.repeat(jnp.eye(B, dtype=f32), N, axis=0)                # [BN, B]
    pad = jnp.zeros((BN, AB_LANES - (C + 1 + B)), f32)
    amat = jnp.concatenate([-2.0 * x, jnp.ones((BN, 1), f32),
                            BIG * onehot, pad], axis=1)                  # [BN, 8]
    btmat = jnp.concatenate([x, rowsq, 1.0 - onehot, pad], axis=1)       # [BN, 8]
    xx = (x[:, :, None] * x[:, None, :]).reshape(BN, C * C)              # [BN, 9]
    xquad = jnp.concatenate([x, xx], axis=1)                             # [BN, 12]

    # No grid: single kernel invocation, everything resident in VMEM.
    out = pl.pallas_call(
        _jarvis_kernel,
        out_shape=jax.ShapeDtypeStruct((OUT_ROWS, OUT_LANES), f32),
    )(amat, btmat, xquad, wslab, bslab)
    return out[:B, :1]


# ---------------------------------------------------------------------------
# Deterministic parameter construction (BN folded into conv/linear weights)
# and slab packing.
# ---------------------------------------------------------------------------
def make_params(key):
    eps = 1e-5

    def dense_with_bn(k, fan_in, fan_out):
        ks = jax.random.split(k, 6)
        w = jax.random.normal(ks[0], (fan_in, fan_out), jnp.float32) / np.sqrt(fan_in)
        b = 0.1 * jax.random.normal(ks[1], (fan_out,), jnp.float32)
        gamma = 1.0 + 0.1 * jax.random.normal(ks[2], (fan_out,), jnp.float32)
        beta = 0.1 * jax.random.normal(ks[3], (fan_out,), jnp.float32)
        rmean = 0.1 * jax.random.normal(ks[4], (fan_out,), jnp.float32)
        rvar = jax.random.uniform(ks[5], (fan_out,), jnp.float32, 0.5, 1.5)
        scale = gamma / jnp.sqrt(rvar + eps)
        return w * scale[None, :], ((b - rmean) * scale + beta)[None, :]

    def dense_plain(k, fan_in, fan_out):
        ks = jax.random.split(k, 2)
        w = jax.random.normal(ks[0], (fan_in, fan_out), jnp.float32) / np.sqrt(fan_in)
        b = (0.1 * jax.random.normal(ks[1], (fan_out,), jnp.float32))[None, :]
        return w, b

    keys = jax.random.split(key, len(_LAYER_NAMES))
    params = {}
    for k, name in zip(keys, _LAYER_NAMES):
        fi, fo = _LAYER_DIMS[name]
        make = dense_plain if name in ("f4", "f5") else dense_with_bn
        params[name] = make(k, fi, fo)
    return params


def pack_params(params):
    wslab = jnp.zeros(W_SLAB_SHAPE, jnp.float32)
    bslab = jnp.zeros(B_SLAB_SHAPE, jnp.float32)
    for name in _LAYER_NAMES:
        w, b = params[name]
        fi, fo = _LAYER_DIMS[name]
        assert w.shape == (fi, fo) and b.shape == (1, fo)
        c0 = _W_COL[name]
        r = _B_ROW[name]
        wslab = wslab.at[0:fi, c0:c0 + fo].set(w)
        bslab = bslab.at[r:r + 1, 0:fo].set(b)
    return wslab, bslab


# ---------------------------------------------------------------------------
# Pure-JAX reference of the same forward pass (for a sanity check).
# ---------------------------------------------------------------------------
def reference_forward(data, params):
    sq = jnp.sum(data * data, axis=2, keepdims=True)
    dmat = sq - 2.0 * jnp.einsum('bnc,bmc->bnm', data, data) + jnp.swapaxes(sq, 1, 2)
    idx = jax.lax.top_k(-dmat, K)[1]
    knn_x = jax.vmap(lambda p, i: p[i])(data, idx)                     # [B, N, K, C]
    cen = knn_x - jnp.mean(knn_x, axis=2, keepdims=True)
    cov = jnp.einsum('bnkc,bnkd->bncd', cen, cen).reshape(B, N, C * C)
    x = jnp.concatenate([data, cov], axis=2)                           # [B, N, 12]

    def dense(v, name, act):
        w, b = params[name]
        return act(v @ w + b)

    relu = jax.nn.relu
    h = dense(x, "w1", relu)
    h = dense(h, "w2", relu)
    h = dense(h, "w4", relu)
    v = jnp.max(h, axis=1)                                             # [B, INSIZE]
    v = dense(v, "f1", relu)
    v = dense(v, "f2", relu)
    v = dense(v, "f3", relu)
    v = dense(v, "f4", jnp.tanh)
    v = dense(v, "f5", jax.nn.sigmoid)
    return v                                                           # [B, 1]


if __name__ == "__main__":
    key = jax.random.PRNGKey(0)
    kd, kp = jax.random.split(key)
    data = jax.random.normal(kd, (B, N, C), jnp.float32)               # [B, N, 3]
    params = make_params(kp)
    wslab, bslab = pack_params(params)

    out = jax.block_until_ready(jarvis_forward(data, wslab, bslab))    # [B, 1]

    ref = jax.block_until_ready(reference_forward(data, params))
    np.testing.assert_allclose(np.asarray(out), np.asarray(ref), atol=1e-3, rtol=1e-3)
    print("KERNEL_OK")
</pallas_src>

<mosaic_0001>
module attributes {stable_mosaic.version = 11 : i64} {
  func.func @_jarvis_kernel(%arg0: memref<64x8xf32, #tpu.memory_space<vmem>>, %arg1: memref<64x8xf32, #tpu.memory_space<vmem>>, %arg2: memref<64x12xf32, #tpu.memory_space<vmem>>, %arg3: memref<32x256xf32, #tpu.memory_space<vmem>>, %arg4: memref<8x128xf32, #tpu.memory_space<vmem>>, %arg5: memref<8x128xf32, #tpu.memory_space<vmem>>) attributes {dimension_semantics = [], scalar_prefetch = 0 : i64, scratch_operands = 0 : i64, tpu.core_type = #tpu.core_type<tc>} {
    %c0 = arith.constant 0 : index
    %c0_0 = arith.constant 0 : index
    %0 = vector.load %arg0[%c0, %c0_0] : memref<64x8xf32, #tpu.memory_space<vmem>>, vector<64x8xf32>
    %c0_1 = arith.constant 0 : index
    %c0_2 = arith.constant 0 : index
    %1 = vector.load %arg1[%c0_1, %c0_2] : memref<64x8xf32, #tpu.memory_space<vmem>>, vector<64x8xf32>
    %c0_3 = arith.constant 0 : index
    %c0_4 = arith.constant 0 : index
    %2 = vector.load %arg2[%c0_3, %c0_4] : memref<64x12xf32, #tpu.memory_space<vmem>>, vector<64x12xf32>
    %3 = vector.extract_strided_slice %2 {offsets = [0, 0], sizes = [64, 3], strides = [1, 1]} : vector<64x12xf32> to vector<64x3xf32>
    %cst = arith.constant dense<0.000000e+00> : vector<64x64xf32>
    %4 = tpu.matmul %0, %1, %cst {dimension_numbers = #tpu.dot_dimension_numbers<[1], [1], [0], [0], [0, 0, 1, 0], [], []>} : vector<64x8xf32>, vector<64x8xf32>, vector<64x64xf32> -> vector<64x64xf32>
    %5 = tpu.bitcast %4 : vector<64x64xf32> -> vector<64x64xi32>
    %6 = tpu.iota {dimensions = array<i32: 1>} : vector<64x64xi32>
    %c-64_i32 = arith.constant -64 : i32
    %7 = vector.broadcast %c-64_i32 : i32 to vector<64x64xi32>
    %8 = arith.andi %5, %7 : vector<64x64xi32>
    %9 = arith.ori %8, %6 : vector<64x64xi32>
    %10 = tpu.bitcast %9 : vector<64x64xi32> -> vector<64x64xf32>
    %false = arith.constant false
    %11 = vector.broadcast %false : i1 to vector<64x64xi1>
    %cst_5 = arith.constant 3.000000e+38 : f32
    %c0_i32 = arith.constant 0 : i32
    %cst_6 = arith.constant dense<0x7F800000> : vector<64xf32>
    %12 = vector.multi_reduction <minimumf>, %10, %cst_6 [1] : vector<64x64xf32> to vector<64xf32>
    %13 = vector.shape_cast %12 : vector<64xf32> to vector<64x1xf32>
    %14 = vector.broadcast %13 : vector<64x1xf32> to vector<64x64xf32>
    %15 = arith.cmpf oeq, %10, %14 : vector<64x64xf32>
    %16 = vector.broadcast %cst_5 : f32 to vector<64x64xf32>
    %17 = arith.select %15, %16, %10 : vector<64x64xi1>, vector<64x64xf32>
    %18 = arith.ori %11, %15 : vector<64x64xi1>
    %c1_i32 = arith.constant 1 : i32
    %cst_7 = arith.constant dense<0x7F800000> : vector<64xf32>
    %19 = vector.multi_reduction <minimumf>, %17, %cst_7 [1] : vector<64x64xf32> to vector<64xf32>
    %20 = vector.shape_cast %19 : vector<64xf32> to vector<64x1xf32>
    %21 = vector.broadcast %20 : vector<64x1xf32> to vector<64x64xf32>
    %22 = arith.cmpf oeq, %17, %21 : vector<64x64xf32>
    %23 = vector.broadcast %cst_5 : f32 to vector<64x64xf32>
    %24 = arith.select %22, %23, %17 : vector<64x64xi1>, vector<64x64xf32>
    %25 = arith.ori %18, %22 : vector<64x64xi1>
    %c2_i32 = arith.constant 2 : i32
    %cst_8 = arith.constant dense<0x7F800000> : vector<64xf32>
    %26 = vector.multi_reduction <minimumf>, %24, %cst_8 [1] : vector<64x64xf32> to vector<64xf32>
    %27 = vector.shape_cast %26 : vector<64xf32> to vector<64x1xf32>
    %28 = vector.broadcast %27 : vector<64x1xf32> to vector<64x64xf32>
    %29 = arith.cmpf oeq, %24, %28 : vector<64x64xf32>
    %30 = vector.broadcast %cst_5 : f32 to vector<64x64xf32>
    %31 = arith.select %29, %30, %24 : vector<64x64xi1>, vector<64x64xf32>
    %32 = arith.ori %25, %29 : vector<64x64xi1>
    %c3_i32 = arith.constant 3 : i32
    %cst_9 = arith.constant dense<0x7F800000> : vector<64xf32>
    %33 = vector.multi_reduction <minimumf>, %31, %cst_9 [1] : vector<64x64xf32> to vector<64xf32>
    %34 = vector.shape_cast %33 : vector<64xf32> to vector<64x1xf32>
    %35 = vector.broadcast %34 : vector<64x1xf32> to vector<64x64xf32>
    %36 = arith.cmpf oeq, %31, %35 : vector<64x64xf32>
    %37 = vector.broadcast %cst_5 : f32 to vector<64x64xf32>
    %38 = arith.select %36, %37, %31 : vector<64x64xi1>, vector<64x64xf32>
    %39 = arith.ori %32, %36 : vector<64x64xi1>
    %c4_i32 = arith.constant 4 : i32
    %cst_10 = arith.constant dense<0x7F800000> : vector<64xf32>
    %40 = vector.multi_reduction <minimumf>, %38, %cst_10 [1] : vector<64x64xf32> to vector<64xf32>
    %41 = vector.shape_cast %40 : vector<64xf32> to vector<64x1xf32>
    %42 = vector.broadcast %41 : vector<64x1xf32> to vector<64x64xf32>
    %43 = arith.cmpf oeq, %38, %42 : vector<64x64xf32>
    %44 = vector.broadcast %cst_5 : f32 to vector<64x64xf32>
    %45 = arith.select %43, %44, %38 : vector<64x64xi1>, vector<64x64xf32>
    %46 = arith.ori %39, %43 : vector<64x64xi1>
    %c5_i32 = arith.constant 5 : i32
    %cst_11 = arith.constant dense<0x7F800000> : vector<64xf32>
    %47 = vector.multi_reduction <minimumf>, %45, %cst_11 [1] : vector<64x64xf32> to vector<64xf32>
    %48 = vector.shape_cast %47 : vector<64xf32> to vector<64x1xf32>
    %49 = vector.broadcast %48 : vector<64x1xf32> to vector<64x64xf32>
    %50 = arith.cmpf oeq, %45, %49 : vector<64x64xf32>
    %51 = vector.broadcast %cst_5 : f32 to vector<64x64xf32>
    %52 = arith.select %50, %51, %45 : vector<64x64xi1>, vector<64x64xf32>
    %53 = arith.ori %46, %50 : vector<64x64xi1>
    %c6_i32 = arith.constant 6 : i32
    %cst_12 = arith.constant dense<0x7F800000> : vector<64xf32>
    %54 = vector.multi_reduction <minimumf>, %52, %cst_12 [1] : vector<64x64xf32> to vector<64xf32>
    %55 = vector.shape_cast %54 : vector<64xf32> to vector<64x1xf32>
    %56 = vector.broadcast %55 : vector<64x1xf32> to vector<64x64xf32>
    %57 = arith.cmpf oeq, %52, %56 : vector<64x64xf32>
    %58 = vector.broadcast %cst_5 : f32 to vector<64x64xf32>
    %59 = arith.select %57, %58, %52 : vector<64x64xi1>, vector<64x64xf32>
    %60 = arith.ori %53, %57 : vector<64x64xi1>
    %c7_i32 = arith.constant 7 : i32
    %cst_13 = arith.constant dense<0x7F800000> : vector<64xf32>
    %61 = vector.multi_reduction <minimumf>, %59, %cst_13 [1] : vector<64x64xf32> to vector<64xf32>
    %62 = vector.shape_cast %61 : vector<64xf32> to vector<64x1xf32>
    %63 = vector.broadcast %62 : vector<64x1xf32> to vector<64x64xf32>
    %64 = arith.cmpf oeq, %59, %63 : vector<64x64xf32>
    %65 = vector.broadcast %cst_5 : f32 to vector<64x64xf32>
    %66 = arith.select %64, %65, %59 : vector<64x64xi1>, vector<64x64xf32>
    %67 = arith.ori %60, %64 : vector<64x64xi1>
    %c8_i32 = arith.constant 8 : i32
    %cst_14 = arith.constant dense<0x7F800000> : vector<64xf32>
    %68 = vector.multi_reduction <minimumf>, %66, %cst_14 [1] : vector<64x64xf32> to vector<64xf32>
    %69 = vector.shape_cast %68 : vector<64xf32> to vector<64x1xf32>
    %70 = vector.broadcast %69 : vector<64x1xf32> to vector<64x64xf32>
    %71 = arith.cmpf oeq, %66, %70 : vector<64x64xf32>
    %72 = vector.broadcast %cst_5 : f32 to vector<64x64xf32>
    %73 = arith.select %71, %72, %66 : vector<64x64xi1>, vector<64x64xf32>
    %74 = arith.ori %67, %71 : vector<64x64xi1>
    %c9_i32 = arith.constant 9 : i32
    %cst_15 = arith.constant dense<0x7F800000> : vector<64xf32>
    %75 = vector.multi_reduction <minimumf>, %73, %cst_15 [1] : vector<64x64xf32> to vector<64xf32>
    %76 = vector.shape_cast %75 : vector<64xf32> to vector<64x1xf32>
    %77 = vector.broadcast %76 : vector<64x1xf32> to vector<64x64xf32>
    %78 = arith.cmpf oeq, %73, %77 : vector<64x64xf32>
    %79 = vector.broadcast %cst_5 : f32 to vector<64x64xf32>
    %80 = arith.select %78, %79, %73 : vector<64x64xi1>, vector<64x64xf32>
    %81 = arith.ori %74, %78 : vector<64x64xi1>
    %c10_i32 = arith.constant 10 : i32
    %cst_16 = arith.constant dense<0x7F800000> : vector<64xf32>
    %82 = vector.multi_reduction <minimumf>, %80, %cst_16 [1] : vector<64x64xf32> to vector<64xf32>
    %83 = vector.shape_cast %82 : vector<64xf32> to vector<64x1xf32>
    %84 = vector.broadcast %83 : vector<64x1xf32> to vector<64x64xf32>
    %85 = arith.cmpf oeq, %80, %84 : vector<64x64xf32>
    %86 = vector.broadcast %cst_5 : f32 to vector<64x64xf32>
    %87 = arith.select %85, %86, %80 : vector<64x64xi1>, vector<64x64xf32>
    %88 = arith.ori %81, %85 : vector<64x64xi1>
    %c11_i32 = arith.constant 11 : i32
    %cst_17 = arith.constant dense<0x7F800000> : vector<64xf32>
    %89 = vector.multi_reduction <minimumf>, %87, %cst_17 [1] : vector<64x64xf32> to vector<64xf32>
    %90 = vector.shape_cast %89 : vector<64xf32> to vector<64x1xf32>
    %91 = vector.broadcast %90 : vector<64x1xf32> to vector<64x64xf32>
    %92 = arith.cmpf oeq, %87, %91 : vector<64x64xf32>
    %93 = vector.broadcast %cst_5 : f32 to vector<64x64xf32>
    %94 = arith.select %92, %93, %87 : vector<64x64xi1>, vector<64x64xf32>
    %95 = arith.ori %88, %92 : vector<64x64xi1>
    %c12_i32 = arith.constant 12 : i32
    %cst_18 = arith.constant dense<0x7F800000> : vector<64xf32>
    %96 = vector.multi_reduction <minimumf>, %94, %cst_18 [1] : vector<64x64xf32> to vector<64xf32>
    %97 = vector.shape_cast %96 : vector<64xf32> to vector<64x1xf32>
    %98 = vector.broadcast %97 : vector<64x1xf32> to vector<64x64xf32>
    %99 = arith.cmpf oeq, %94, %98 : vector<64x64xf32>
    %100 = vector.broadcast %cst_5 : f32 to vector<64x64xf32>
    %101 = arith.select %99, %100, %94 : vector<64x64xi1>, vector<64x64xf32>
    %102 = arith.ori %95, %99 : vector<64x64xi1>
    %c13_i32 = arith.constant 13 : i32
    %cst_19 = arith.constant dense<0x7F800000> : vector<64xf32>
    %103 = vector.multi_reduction <minimumf>, %101, %cst_19 [1] : vector<64x64xf32> to vector<64xf32>
    %104 = vector.shape_cast %103 : vector<64xf32> to vector<64x1xf32>
    %105 = vector.broadcast %104 : vector<64x1xf32> to vector<64x64xf32>
    %106 = arith.cmpf oeq, %101, %105 : vector<64x64xf32>
    %107 = vector.broadcast %cst_5 : f32 to vector<64x64xf32>
    %108 = arith.select %106, %107, %101 : vector<64x64xi1>, vector<64x64xf32>
    %109 = arith.ori %102, %106 : vector<64x64xi1>
    %c14_i32 = arith.constant 14 : i32
    %cst_20 = arith.constant dense<0x7F800000> : vector<64xf32>
    %110 = vector.multi_reduction <minimumf>, %108, %cst_20 [1] : vector<64x64xf32> to vector<64xf32>
    %111 = vector.shape_cast %110 : vector<64xf32> to vector<64x1xf32>
    %112 = vector.broadcast %111 : vector<64x1xf32> to vector<64x64xf32>
    %113 = arith.cmpf oeq, %108, %112 : vector<64x64xf32>
    %114 = vector.broadcast %cst_5 : f32 to vector<64x64xf32>
    %115 = arith.select %113, %114, %108 : vector<64x64xi1>, vector<64x64xf32>
    %116 = arith.ori %109, %113 : vector<64x64xi1>
    %c15_i32 = arith.constant 15 : i32
    %cst_21 = arith.constant dense<0x7F800000> : vector<64xf32>
    %117 = vector.multi_reduction <minimumf>, %115, %cst_21 [1] : vector<64x64xf32> to vector<64xf32>
    %118 = vector.shape_cast %117 : vector<64xf32> to vector<64x1xf32>
    %119 = vector.broadcast %118 : vector<64x1xf32> to vector<64x64xf32>
    %120 = arith.cmpf oeq, %115, %119 : vector<64x64xf32>
    %121 = vector.broadcast %cst_5 : f32 to vector<64x64xf32>
    %122 = arith.select %120, %121, %115 : vector<64x64xi1>, vector<64x64xf32>
    %123 = arith.ori %116, %120 : vector<64x64xi1>
    %124 = arith.extui %123 : vector<64x64xi1> to vector<64x64xi32>
    %125 = arith.sitofp %124 : vector<64x64xi32> to vector<64x64xf32>
    %cst_22 = arith.constant dense<0.000000e+00> : vector<64x12xf32>
    %126 = tpu.matmul %125, %2, %cst_22 {dimension_numbers = #tpu.dot_dimension_numbers<[1], [0], [0], [1], [0, 0, 1, 1], [], []>} : vector<64x64xf32>, vector<64x12xf32>, vector<64x12xf32> -> vector<64x12xf32>
    %127 = vector.extract_strided_slice %126 {offsets = [0, 0], sizes = [64, 3], strides = [1, 1]} : vector<64x12xf32> to vector<64x3xf32>
    %cst_23 = arith.constant 6.250000e-02 : f32
    %128 = vector.broadcast %cst_23 : f32 to vector<64x3xf32>
    %129 = arith.mulf %127, %128 : vector<64x3xf32>
    %130 = vector.extract_strided_slice %126 {offsets = [0, 3], sizes = [64, 9], strides = [1, 1]} : vector<64x12xf32> to vector<64x9xf32>
    %131 = vector.extract_strided_slice %129 {offsets = [0, 0], sizes = [64, 1], strides = [1, 1]} : vector<64x3xf32> to vector<64x1xf32>
    %132 = vector.broadcast %131 : vector<64x1xf32> to vector<64x3xf32>
    %133 = arith.mulf %132, %129 : vector<64x3xf32>
    %134 = vector.extract_strided_slice %129 {offsets = [0, 1], sizes = [64, 1], strides = [1, 1]} : vector<64x3xf32> to vector<64x1xf32>
    %135 = vector.broadcast %134 : vector<64x1xf32> to vector<64x3xf32>
    %136 = arith.mulf %135, %129 : vector<64x3xf32>
    %137 = vector.extract_strided_slice %129 {offsets = [0, 2], sizes = [64, 1], strides = [1, 1]} : vector<64x3xf32> to vector<64x1xf32>
    %138 = vector.broadcast %137 : vector<64x1xf32> to vector<64x3xf32>
    %139 = arith.mulf %138, %129 : vector<64x3xf32>
    %140 = tpu.concatenate %133, %136, %139 in 1 : vector<64x3xf32>, vector<64x3xf32>, vector<64x3xf32> -> vector<64x9xf32>
    %cst_24 = arith.constant 1.600000e+01 : f32
    %141 = vector.broadcast %cst_24 : f32 to vector<64x9xf32>
    %142 = arith.mulf %141, %140 : vector<64x9xf32>
    %143 = arith.subf %130, %142 : vector<64x9xf32>
    %144 = tpu.concatenate %3, %143 in 1 : vector<64x3xf32>, vector<64x9xf32> -> vector<64x12xf32>
    %c0_25 = arith.constant 0 : index
    %c0_26 = arith.constant 0 : index
    %145 = vector.load %arg3[%c0_25, %c0_26] : memref<32x256xf32, #tpu.memory_space<vmem>>, vector<12x32xf32>
    %cst_27 = arith.constant dense<0.000000e+00> : vector<64x32xf32>
    %146 = tpu.matmul %144, %145, %cst_27 {dimension_numbers = #tpu.dot_dimension_numbers<[1], [0], [0], [1], [0, 0, 1, 1], [], []>} : vector<64x12xf32>, vector<12x32xf32>, vector<64x32xf32> -> vector<64x32xf32>
    %c0_28 = arith.constant 0 : index
    %c0_29 = arith.constant 0 : index
    %147 = vector.load %arg4[%c0_28, %c0_29] : memref<8x128xf32, #tpu.memory_space<vmem>>, vector<1x32xf32>
    %148 = vector.broadcast %147 : vector<1x32xf32> to vector<64x32xf32>
    %149 = arith.addf %146, %148 : vector<64x32xf32>
    %cst_30 = arith.constant 0.000000e+00 : f32
    %150 = vector.broadcast %cst_30 : f32 to vector<64x32xf32>
    %151 = arith.maximumf %149, %150 : vector<64x32xf32>
    %c0_31 = arith.constant 0 : index
    %c32 = arith.constant 32 : index
    %152 = vector.load %arg3[%c0_31, %c32] : memref<32x256xf32, #tpu.memory_space<vmem>>, vector<32x32xf32>
    %cst_32 = arith.constant dense<0.000000e+00> : vector<64x32xf32>
    %153 = tpu.matmul %151, %152, %cst_32 {dimension_numbers = #tpu.dot_dimension_numbers<[1], [0], [0], [1], [0, 0, 1, 1], [], []>} : vector<64x32xf32>, vector<32x32xf32>, vector<64x32xf32> -> vector<64x32xf32>
    %c1 = arith.constant 1 : index
    %c0_33 = arith.constant 0 : index
    %154 = vector.load %arg4[%c1, %c0_33] : memref<8x128xf32, #tpu.memory_space<vmem>>, vector<1x32xf32>
    %155 = vector.broadcast %154 : vector<1x32xf32> to vector<64x32xf32>
    %156 = arith.addf %153, %155 : vector<64x32xf32>
    %cst_34 = arith.constant 0.000000e+00 : f32
    %157 = vector.broadcast %cst_34 : f32 to vector<64x32xf32>
    %158 = arith.maximumf %156, %157 : vector<64x32xf32>
    %c0_35 = arith.constant 0 : index
    %c64 = arith.constant 64 : index
    %159 = vector.load %arg3[%c0_35, %c64] : memref<32x256xf32, #tpu.memory_space<vmem>>, vector<32x32xf32>
    %cst_36 = arith.constant dense<0.000000e+00> : vector<64x32xf32>
    %160 = tpu.matmul %158, %159, %cst_36 {dimension_numbers = #tpu.dot_dimension_numbers<[1], [0], [0], [1], [0, 0, 1, 1], [], []>} : vector<64x32xf32>, vector<32x32xf32>, vector<64x32xf32> -> vector<64x32xf32>
    %c2 = arith.constant 2 : index
    %c0_37 = arith.constant 0 : index
    %161 = vector.load %arg4[%c2, %c0_37] : memref<8x128xf32, #tpu.memory_space<vmem>>, vector<1x32xf32>
    %162 = vector.broadcast %161 : vector<1x32xf32> to vector<64x32xf32>
    %163 = arith.addf %160, %162 : vector<64x32xf32>
    %cst_38 = arith.constant 0.000000e+00 : f32
    %164 = vector.broadcast %cst_38 : f32 to vector<64x32xf32>
    %165 = arith.maximumf %163, %164 : vector<64x32xf32>
    %166 = vector.extract_strided_slice %165 {offsets = [0, 0], sizes = [32, 32], strides = [1, 1]} : vector<64x32xf32> to vector<32x32xf32>
    %cst_39 = arith.constant dense<0xFF800000> : vector<32xf32>
    %167 = vector.multi_reduction <maximumf>, %166, %cst_39 [0] : vector<32x32xf32> to vector<32xf32>
    %168 = vector.shape_cast %167 : vector<32xf32> to vector<1x32xf32>
    %169 = vector.extract_strided_slice %165 {offsets = [32, 0], sizes = [32, 32], strides = [1, 1]} : vector<64x32xf32> to vector<32x32xf32>
    %cst_40 = arith.constant dense<0xFF800000> : vector<32xf32>
    %170 = vector.multi_reduction <maximumf>, %169, %cst_40 [0] : vector<32x32xf32> to vector<32xf32>
    %171 = vector.shape_cast %170 : vector<32xf32> to vector<1x32xf32>
    %cst_41 = arith.constant 0.000000e+00 : f32
    %172 = vector.broadcast %cst_41 : f32 to vector<6x32xf32>
    %173 = tpu.concatenate %168, %171, %172 in 0 : vector<1x32xf32>, vector<1x32xf32>, vector<6x32xf32> -> vector<8x32xf32>
    %c0_42 = arith.constant 0 : index
    %c96 = arith.constant 96 : index
    %174 = vector.load %arg3[%c0_42, %c96] : memref<32x256xf32, #tpu.memory_space<vmem>>, vector<32x16xf32>
    %cst_43 = arith.constant dense<0.000000e+00> : vector<8x16xf32>
    %175 = tpu.matmul %173, %174, %cst_43 {dimension_numbers = #tpu.dot_dimension_numbers<[1], [0], [0], [1], [0, 0, 1, 1], [], []>} : vector<8x32xf32>, vector<32x16xf32>, vector<8x16xf32> -> vector<8x16xf32>
    %c3 = arith.constant 3 : index
    %c0_44 = arith.constant 0 : index
    %176 = vector.load %arg4[%c3, %c0_44] : memref<8x128xf32, #tpu.memory_space<vmem>>, vector<1x16xf32>
    %177 = vector.broadcast %176 : vector<1x16xf32> to vector<8x16xf32>
    %178 = arith.addf %175, %177 : vector<8x16xf32>
    %cst_45 = arith.constant 0.000000e+00 : f32
    %179 = vector.broadcast %cst_45 : f32 to vector<8x16xf32>
    %180 = arith.maximumf %178, %179 : vector<8x16xf32>
    %c0_46 = arith.constant 0 : index
    %c112 = arith.constant 112 : index
    %181 = vector.load %arg3[%c0_46, %c112] : memref<32x256xf32, #tpu.memory_space<vmem>>, vector<16x8xf32>
    %cst_47 = arith.constant dense<0.000000e+00> : vector<8x8xf32>
    %182 = tpu.matmul %180, %181, %cst_47 {dimension_numbers = #tpu.dot_dimension_numbers<[1], [0], [0], [1], [0, 0, 1, 1], [], []>} : vector<8x16xf32>, vector<16x8xf32>, vector<8x8xf32> -> vector<8x8xf32>
    %c4 = arith.constant 4 : index
    %c0_48 = arith.constant 0 : index
    %183 = vector.load %arg4[%c4, %c0_48] : memref<8x128xf32, #tpu.memory_space<vmem>>, vector<1x8xf32>
    %184 = vector.broadcast %183 : vector<1x8xf32> to vector<8x8xf32>
    %185 = arith.addf %182, %184 : vector<8x8xf32>
    %cst_49 = arith.constant 0.000000e+00 : f32
    %186 = vector.broadcast %cst_49 : f32 to vector<8x8xf32>
    %187 = arith.maximumf %185, %186 : vector<8x8xf32>
    %c0_50 = arith.constant 0 : index
    %c120 = arith.constant 120 : index
    %188 = vector.load %arg3[%c0_50, %c120] : memref<32x256xf32, #tpu.memory_space<vmem>>, vector<8x4xf32>
    %cst_51 = arith.constant dense<0.000000e+00> : vector<8x4xf32>
    %189 = tpu.matmul %187, %188, %cst_51 {dimension_numbers = #tpu.dot_dimension_numbers<[1], [0], [0], [1], [0, 0, 1, 1], [], []>} : vector<8x8xf32>, vector<8x4xf32>, vector<8x4xf32> -> vector<8x4xf32>
    %c5 = arith.constant 5 : index
    %c0_52 = arith.constant 0 : index
    %190 = vector.load %arg4[%c5, %c0_52] : memref<8x128xf32, #tpu.memory_space<vmem>>, vector<1x4xf32>
    %191 = vector.broadcast %190 : vector<1x4xf32> to vector<8x4xf32>
    %192 = arith.addf %189, %191 : vector<8x4xf32>
    %cst_53 = arith.constant 0.000000e+00 : f32
    %193 = vector.broadcast %cst_53 : f32 to vector<8x4xf32>
    %194 = arith.maximumf %192, %193 : vector<8x4xf32>
    %c0_54 = arith.constant 0 : index
    %c124 = arith.constant 124 : index
    %195 = vector.load %arg3[%c0_54, %c124] : memref<32x256xf32, #tpu.memory_space<vmem>>, vector<4x4xf32>
    %cst_55 = arith.constant dense<0.000000e+00> : vector<8x4xf32>
    %196 = tpu.matmul %194, %195, %cst_55 {dimension_numbers = #tpu.dot_dimension_numbers<[1], [0], [0], [1], [0, 0, 1, 1], [], []>} : vector<8x4xf32>, vector<4x4xf32>, vector<8x4xf32> -> vector<8x4xf32>
    %c6 = arith.constant 6 : index
    %c0_56 = arith.constant 0 : index
    %197 = vector.load %arg4[%c6, %c0_56] : memref<8x128xf32, #tpu.memory_space<vmem>>, vector<1x4xf32>
    %198 = vector.broadcast %197 : vector<1x4xf32> to vector<8x4xf32>
    %199 = arith.addf %196, %198 : vector<8x4xf32>
    %200 = math.tanh %199 : vector<8x4xf32>
    %c0_57 = arith.constant 0 : index
    %c128 = arith.constant 128 : index
    %201 = vector.load %arg3[%c0_57, %c128] : memref<32x256xf32, #tpu.memory_space<vmem>>, vector<4x1xf32>
    %cst_58 = arith.constant dense<0.000000e+00> : vector<8x1xf32>
    %202 = tpu.matmul %200, %201, %cst_58 {dimension_numbers = #tpu.dot_dimension_numbers<[1], [0], [0], [1], [0, 0, 1, 1], [], []>} : vector<8x4xf32>, vector<4x1xf32>, vector<8x1xf32> -> vector<8x1xf32>
    %c7 = arith.constant 7 : index
    %c0_59 = arith.constant 0 : index
    %203 = vector.load %arg4[%c7, %c0_59] : memref<8x128xf32, #tpu.memory_space<vmem>>, vector<1x1xf32>
    %204 = vector.broadcast %203 : vector<1x1xf32> to vector<8x1xf32>
    %205 = arith.addf %202, %204 : vector<8x1xf32>
    %206 = arith.negf %205 : vector<8x1xf32>
    %207 = math.exp %206 : vector<8x1xf32>
    %cst_60 = arith.constant 1.000000e+00 : f32
    %208 = vector.broadcast %cst_60 : f32 to vector<8x1xf32>
    %209 = arith.addf %208, %207 : vector<8x1xf32>
    %210 = arith.divf %208, %209 : vector<8x1xf32>
    %211 = vector.shape_cast %210 : vector<8x1xf32> to vector<8x1xf32>
    %212 = vector.broadcast %211 : vector<8x1xf32> to vector<8x128xf32>
    %c0_61 = arith.constant 0 : index
    %c0_62 = arith.constant 0 : index
    %213 = vector.load %arg5[%c0_61, %c0_62] : memref<8x128xf32, #tpu.memory_space<vmem>>, vector<8x128xf32>
    tpu.vector_store %arg5[%c0_61, %c0_62], %212 {strides = array<i32>} : memref<8x128xf32, #tpu.memory_space<vmem>>, vector<8x128xf32>,
    return
  }
}

</mosaic_0001>

<llo_original>
// kernel: jarvis_forward.1
$region0: #{jarvis_forward.1}
  #allocation0 [shape = 'u32[]', space=smem, size = 0x4, offset = 0x4, fixed_abs, tag = 'smem constant byte address 0x4 - core index']
  #allocation1 [shape = 'u32[72,128]{1,0:T(1,128)}', space=vmem, size = 0x9000, scoped, tag = 'internal scratch']
  %s0 = inlined_call_operand.vmem [shape: f32[64,8], index: 0, kind: input, shape index: {}]
  %s1 = inlined_call_operand.vmem [shape: f32[64,8], index: 1, kind: input, shape index: {}]
  %s2 = inlined_call_operand.vmem [shape: f32[64,12], index: 2, kind: input, shape index: {}]
  %s3 = inlined_call_operand.vmem [shape: f32[32,256], index: 3, kind: input, shape index: {}]
  %s4 = inlined_call_operand.vmem [shape: f32[8,128], index: 4, kind: input, shape index: {}]
  %s5 = inlined_call_operand.vmem [shape: f32[8,128], index: 5, kind: output, shape index: {}]
  %s6 = sld [smem:[#allocation0]]
  $region30: #{jarvis_forward.1} parent=0
    _
  %s8 = ssub.s32 1, %s6
  %s9 = scalar_select 0, %s8, %s6
  // Predicated region
  $region2: #{jarvis_forward.1} parent=0 // pred_check
    _
  $region3: #{jarvis_forward.1} parent=0 // pred_check_branch
    %11 = sbr.rel (0) target = $region5
  $region4: #{jarvis_forward.1} parent=0 // pred_region
    _
  $region5: #{jarvis_forward.1} parent=0 // pred_fallthru
    _
  // Predicated region
  $region6: #{jarvis_forward.1} parent=0 // pred_check
    _
  $region7: #{jarvis_forward.1} parent=0 // pred_check_branch
    %13 = sbr.rel (0) target = $region9
  $region8: #{jarvis_forward.1} parent=0 // pred_region
    _
  $region9: #{jarvis_forward.1} parent=0 // pred_fallthru
    _
  // Predicated region
  $region10: #{jarvis_forward.1} parent=0 // pred_check
    _
  $region11: #{jarvis_forward.1} parent=0 // pred_check_branch
    %15 = sbr.rel (0) target = $region13
  $region12: #{jarvis_forward.1} parent=0 // pred_region
    _
  $region13: #{jarvis_forward.1} parent=0 // pred_fallthru
    _
  // Predicated region
  $region14: #{jarvis_forward.1} parent=0 // pred_check
    _
  $region15: #{jarvis_forward.1} parent=0 // pred_check_branch
    %17 = sbr.rel (0) target = $region17
  $region16: #{jarvis_forward.1} parent=0 // pred_region
    _
  $region17: #{jarvis_forward.1} parent=0 // pred_fallthru
    _
  // Predicated region
  $region18: #{jarvis_forward.1} parent=0 // pred_check
    _
  $region19: #{jarvis_forward.1} parent=0 // pred_check_branch
    %19 = sbr.rel (0) target = $region21
  $region20: #{jarvis_forward.1} parent=0 // pred_region
    _
  $region21: #{jarvis_forward.1} parent=0 // pred_fallthru
    _
  %v20 = vld [vmem:[%s0] sm:$0xff]
  %v21 = vld [vmem:[%s0 + $0x8] sm:$0xff]
  %v22 = vld [vmem:[%s0 + $0x10] sm:$0xff]
  %v23 = vld [vmem:[%s0 + $0x18] sm:$0xff]
  %v24 = vld [vmem:[%s0 + $0x20] sm:$0xff]
  %v25 = vld [vmem:[%s0 + $0x28] sm:$0xff]
  %v26 = vld [vmem:[%s0 + $0x30] sm:$0xff]
  %v27 = vld [vmem:[%s0 + $0x38] sm:$0xff]
  %v28 = vld [vmem:[%s1] sm:$0xff]
  %v29 = vld [vmem:[%s1 + $0x8] sm:$0xff]
  %v30 = vld [vmem:[%s1 + $0x10] sm:$0xff]
  %v31 = vld [vmem:[%s1 + $0x18] sm:$0xff]
  %v32 = vld [vmem:[%s1 + $0x20] sm:$0xff]
  %v33 = vld [vmem:[%s1 + $0x28] sm:$0xff]
  %v34 = vld [vmem:[%s1 + $0x30] sm:$0xff]
  %v35 = vld [vmem:[%s1 + $0x38] sm:$0xff]
  %v36 = vld [vmem:[%s2] sm:$0xff]
  %v37 = vld [vmem:[%s2 + $0x8] sm:$0xff]
  %v38 = vld [vmem:[%s2 + $0x10] sm:$0xff]
  %v39 = vld [vmem:[%s2 + $0x18] sm:$0xff]
  %v40 = vld [vmem:[%s2 + $0x20] sm:$0xff]
  %v41 = vld [vmem:[%s2 + $0x28] sm:$0xff]
  %v42 = vld [vmem:[%s2 + $0x30] sm:$0xff]
  %v43 = vld [vmem:[%s2 + $0x38] sm:$0xff]
  %vm44 = vcmask 64512
  %v46 = vsel %vm44, %v20, 0
  %v49 = vsel %vm44, %v21, 0
  %v52 = vsel %vm44, %v22, 0
  %v55 = vsel %vm44, %v23, 0
  %v58 = vsel %vm44, %v24, 0
  %v61 = vsel %vm44, %v25, 0
  %v64 = vsel %vm44, %v26, 0
  %v67 = vsel %vm44, %v27, 0
  %v70 = vsel %vm44, %v28, 0
  %v73 = vsel %vm44, %v29, 0
  %v76 = vsel %vm44, %v30, 0
  %v79 = vsel %vm44, %v31, 0
  %v82 = vsel %vm44, %v32, 0
  %v85 = vsel %vm44, %v33, 0
  %v88 = vsel %vm44, %v34, 0
  %v91 = vsel %vm44, %v35, 0
  %93 = vmatpush.xpose.msra.mxu0 0.0
  %94 = vmatpush.xpose.msra.mxu0 0.0
  %95 = vmatpush.xpose.msra.mxu0 0.0
  %96 = vmatpush.xpose.msra.mxu0 0.0
  %97 = vmatpush.xpose.msra.mxu0 0.0
  %98 = vmatpush.xpose.msra.mxu0 0.0
  %99 = vmatpush.xpose.msra.mxu0 0.0
  %100 = vmatpush.xpose.msra.mxu0 0.0
  %101 = vmatpush.xpose.msra.mxu0 %v91
  %102 = vmatpush.xpose.msra.mxu0 %v88
  %103 = vmatpush.xpose.msra.mxu0 %v85
  %104 = vmatpush.xpose.msra.mxu0 %v82
  %105 = vmatpush.xpose.msra.mxu0 %v79
  %106 = vmatpush.xpose.msra.mxu0 %v76
  %107 = vmatpush.xpose.msra.mxu0 %v73
  %108 = vmatpush.xpose.msra.mxu0 %v70
  %109 = vmatmul.f32.gmra.mxu0 %v46
  %v110 = vpop.f32.mrf.mxu0
  %v111 = vadd.f32 0.0, %v110
  %112 = vmatmul.f32.gmra.mxu0 %v49
  %v113 = vpop.f32.mrf.mxu0
  %v114 = vadd.f32 0.0, %v113
  %115 = vmatmul.f32.gmra.mxu0 %v52
  %v116 = vpop.f32.mrf.mxu0
  %v117 = vadd.f32 0.0, %v116
  %118 = vmatmul.f32.gmra.mxu0 %v55
  %v119 = vpop.f32.mrf.mxu0
  %v120 = vadd.f32 0.0, %v119
  %121 = vmatmul.f32.gmra.mxu0 %v58
  %v122 = vpop.f32.mrf.mxu0
  %v123 = vadd.f32 0.0, %v122
  %124 = vmatmul.f32.gmra.mxu0 %v61
  %v125 = vpop.f32.mrf.mxu0
  %v126 = vadd.f32 0.0, %v125
  %127 = vmatmul.f32.gmra.mxu0 %v64
  %v128 = vpop.f32.mrf.mxu0
  %v129 = vadd.f32 0.0, %v128
  %130 = vmatmul.f32.gmra.mxu0 %v67
  %v131 = vpop.f32.mrf.mxu0
  %v132 = vadd.f32 0.0, %v131
  %133 = vdwg.mxu0
  %v142 = vlaneseq
  %v143 = vand.u32 %v142, 127
  %v144 = vand.u32 %v111, 4294967232
  %v145 = vand.u32 %v114, 4294967232
  %v146 = vand.u32 %v117, 4294967232
  %v147 = vand.u32 %v120, 4294967232
  %v148 = vand.u32 %v123, 4294967232
  %v149 = vand.u32 %v126, 4294967232
  %v150 = vand.u32 %v129, 4294967232
  %v151 = vand.u32 %v132, 4294967232
  %v152 = vor.u32 %v144, %v143
  %v153 = vor.u32 %v145, %v143
  %v154 = vor.u32 %v146, %v143
  %v155 = vor.u32 %v147, %v143
  %v156 = vor.u32 %v148, %v143
  %v157 = vor.u32 %v149, %v143
  %v158 = vor.u32 %v150, %v143
  %v159 = vor.u32 %v151, %v143
  %vm168 = vcmask 523264
  %v169 = vsel %vm168, %v152, inf
  %170 = vmin.xlane.f32.xlu0 %v169
  %v171 = vpop.xlane.xlu0 %170
  %v172 = vsel %vm168, %v153, inf
  %173 = vmin.xlane.f32.xlu0 %v172
  %v174 = vpop.xlane.xlu0 %173
  %v175 = vsel %vm168, %v154, inf
  %176 = vmin.xlane.f32.xlu0 %v175
  %v177 = vpop.xlane.xlu0 %176
  %v178 = vsel %vm168, %v155, inf
  %179 = vmin.xlane.f32.xlu0 %v178
  %v180 = vpop.xlane.xlu0 %179
  %v181 = vsel %vm168, %v156, inf
  %182 = vmin.xlane.f32.xlu0 %v181
  %v183 = vpop.xlane.xlu0 %182
  %v184 = vsel %vm168, %v157, inf
  %185 = vmin.xlane.f32.xlu0 %v184
  %v186 = vpop.xlane.xlu0 %185
  %v187 = vsel %vm168, %v158, inf
  %188 = vmin.xlane.f32.xlu0 %v187
  %v189 = vpop.xlane.xlu0 %188
  %v190 = vsel %vm168, %v159, inf
  %191 = vmin.xlane.f32.xlu0 %v190
  %v192 = vpop.xlane.xlu0 %191
  %vm193 = vcmp.eq.f32.partialorder %v152, %v171
  %vm194 = vcmp.eq.f32.partialorder %v153, %v174
  %vm195 = vcmp.eq.f32.partialorder %v154, %v177
  %vm196 = vcmp.eq.f32.partialorder %v155, %v180
  %vm197 = vcmp.eq.f32.partialorder %v156, %v183
  %vm198 = vcmp.eq.f32.partialorder %v157, %v186
  %vm199 = vcmp.eq.f32.partialorder %v158, %v189
  %vm200 = vcmp.eq.f32.partialorder %v159, %v192
  %v201 = vsel %vm193, 3e+38, %v152
  %v202 = vsel %vm194, 3e+38, %v153
  %v203 = vsel %vm195, 3e+38, %v154
  %v204 = vsel %vm196, 3e+38, %v155
  %v205 = vsel %vm197, 3e+38, %v156
  %v206 = vsel %vm198, 3e+38, %v157
  %v207 = vsel %vm199, 3e+38, %v158
  %v208 = vsel %vm200, 3e+38, %v159
  %v209 = vsel %vm168, %v201, inf
  %210 = vmin.xlane.f32.xlu0 %v209
  %v211 = vpop.xlane.xlu0 %210
  %v212 = vsel %vm168, %v202, inf
  %213 = vmin.xlane.f32.xlu0 %v212
  %v214 = vpop.xlane.xlu0 %213
  %v215 = vsel %vm168, %v203, inf
  %216 = vmin.xlane.f32.xlu0 %v215
  %v217 = vpop.xlane.xlu0 %216
  %v218 = vsel %vm168, %v204, inf
  %219 = vmin.xlane.f32.xlu0 %v218
  %v220 = vpop.xlane.xlu0 %219
  %v221 = vsel %vm168, %v205, inf
  %222 = vmin.xlane.f32.xlu0 %v221
  %v223 = vpop.xlane.xlu0 %222
  %v224 = vsel %vm168, %v206, inf
  %225 = vmin.xlane.f32.xlu0 %v224
  %v226 = vpop.xlane.xlu0 %225
  %v227 = vsel %vm168, %v207, inf
  %228 = vmin.xlane.f32.xlu0 %v227
  %v229 = vpop.xlane.xlu0 %228
  %v230 = vsel %vm168, %v208, inf
  %231 = vmin.xlane.f32.xlu0 %v230
  %v232 = vpop.xlane.xlu0 %231
  %vm233 = vcmp.eq.f32.partialorder %v201, %v211
  %vm234 = vcmp.eq.f32.partialorder %v202, %v214
  %vm235 = vcmp.eq.f32.partialorder %v203, %v217
  %vm236 = vcmp.eq.f32.partialorder %v204, %v220
  %vm237 = vcmp.eq.f32.partialorder %v205, %v223
  %vm238 = vcmp.eq.f32.partialorder %v206, %v226
  %vm239 = vcmp.eq.f32.partialorder %v207, %v229
  %vm240 = vcmp.eq.f32.partialorder %v208, %v232
  %v241 = vsel %vm233, 3e+38, %v201
  %v242 = vsel %vm234, 3e+38, %v202
  %v243 = vsel %vm235, 3e+38, %v203
  %v244 = vsel %vm236, 3e+38, %v204
  %v245 = vsel %vm237, 3e+38, %v205
  %v246 = vsel %vm238, 3e+38, %v206
  %v247 = vsel %vm239, 3e+38, %v207
  %v248 = vsel %vm240, 3e+38, %v208
  %vm249 = vmor %vm193, %vm233
  %vm250 = vmor %vm194, %vm234
  %vm251 = vmor %vm195, %vm235
  %vm252 = vmor %vm196, %vm236
  %vm253 = vmor %vm197, %vm237
  %vm254 = vmor %vm198, %vm238
  %vm255 = vmor %vm199, %vm239
  %vm256 = vmor %vm200, %vm240
  %v257 = vsel %vm168, %v241, inf
  %258 = vmin.xlane.f32.xlu0 %v257
  %v259 = vpop.xlane.xlu0 %258
  %v260 = vsel %vm168, %v242, inf
  %261 = vmin.xlane.f32.xlu0 %v260
  %v262 = vpop.xlane.xlu0 %261
  %v263 = vsel %vm168, %v243, inf
  %264 = vmin.xlane.f32.xlu0 %v263
  %v265 = vpop.xlane.xlu0 %264
  %v266 = vsel %vm168, %v244, inf
  %267 = vmin.xlane.f32.xlu0 %v266
  %v268 = vpop.xlane.xlu0 %267
  %v269 = vsel %vm168, %v245, inf
  %270 = vmin.xlane.f32.xlu0 %v269
  %v271 = vpop.xlane.xlu0 %270
  %v272 = vsel %vm168, %v246, inf
  %273 = vmin.xlane.f32.xlu0 %v272
  %v274 = vpop.xlane.xlu0 %273
  %v275 = vsel %vm168, %v247, inf
  %276 = vmin.xlane.f32.xlu0 %v275
  %v277 = vpop.xlane.xlu0 %276
  %v278 = vsel %vm168, %v248, inf
  %279 = vmin.xlane.f32.xlu0 %v278
  %v280 = vpop.xlane.xlu0 %279
  %vm281 = vcmp.eq.f32.partialorder %v241, %v259
  %vm282 = vcmp.eq.f32.partialorder %v242, %v262
  %vm283 = vcmp.eq.f32.partialorder %v243, %v265
  %vm284 = vcmp.eq.f32.partialorder %v244, %v268
  %vm285 = vcmp.eq.f32.partialorder %v245, %v271
  %vm286 = vcmp.eq.f32.partialorder %v246, %v274
  %vm287 = vcmp.eq.f32.partialorder %v247, %v277
  %vm288 = vcmp.eq.f32.partialorder %v248, %v280
  %v289 = vsel %vm281, 3e+38, %v241
  %v290 = vsel %vm282, 3e+38, %v242
  %v291 = vsel %vm283, 3e+38, %v243
  %v292 = vsel %vm284, 3e+38, %v244
  %v293 = vsel %vm285, 3e+38, %v245
  %v294 = vsel %vm286, 3e+38, %v246
  %v295 = vsel %vm287, 3e+38, %v247
  %v296 = vsel %vm288, 3e+38, %v248
  %vm297 = vmor %vm249, %vm281
  %vm298 = vmor %vm250, %vm282
  %vm299 = vmor %vm251, %vm283
  %vm300 = vmor %vm252, %vm284
  %vm301 = vmor %vm253, %vm285
  %vm302 = vmor %vm254, %vm286
  %vm303 = vmor %vm255, %vm287
  %vm304 = vmor %vm256, %vm288
  %v305 = vsel %vm168, %v289, inf
  %306 = vmin.xlane.f32.xlu0 %v305
  %v307 = vpop.xlane.xlu0 %306
  %v308 = vsel %vm168, %v290, inf
  %309 = vmin.xlane.f32.xlu0 %v308
  %v310 = vpop.xlane.xlu0 %309
  %v311 = vsel %vm168, %v291, inf
  %312 = vmin.xlane.f32.xlu0 %v311
  %v313 = vpop.xlane.xlu0 %312
  %v314 = vsel %vm168, %v292, inf
  %315 = vmin.xlane.f32.xlu0 %v314
  %v316 = vpop.xlane.xlu0 %315
  %v317 = vsel %vm168, %v293, inf
  %318 = vmin.xlane.f32.xlu0 %v317
  %v319 = vpop.xlane.xlu0 %318
  %v320 = vsel %vm168, %v294, inf
  %321 = vmin.xlane.f32.xlu0 %v320
  %v322 = vpop.xlane.xlu0 %321
  %v323 = vsel %vm168, %v295, inf
  %324 = vmin.xlane.f32.xlu0 %v323
  %v325 = vpop.xlane.xlu0 %324
  %v326 = vsel %vm168, %v296, inf
  %327 = vmin.xlane.f32.xlu0 %v326
  %v328 = vpop.xlane.xlu0 %327
  %vm329 = vcmp.eq.f32.partialorder %v289, %v307
  %vm330 = vcmp.eq.f32.partialorder %v290, %v310
  %vm331 = vcmp.eq.f32.partialorder %v291, %v313
  %vm332 = vcmp.eq.f32.partialorder %v292, %v316
  %vm333 = vcmp.eq.f32.partialorder %v293, %v319
  %vm334 = vcmp.eq.f32.partialorder %v294, %v322
  %vm335 = vcmp.eq.f32.partialorder %v295, %v325
  %vm336 = vcmp.eq.f32.partialorder %v296, %v328
  %v337 = vsel %vm329, 3e+38, %v289
  %v338 = vsel %vm330, 3e+38, %v290
  %v339 = vsel %vm331, 3e+38, %v291
  %v340 = vsel %vm332, 3e+38, %v292
  %v341 = vsel %vm333, 3e+38, %v293
  %v342 = vsel %vm334, 3e+38, %v294
  %v343 = vsel %vm335, 3e+38, %v295
  %v344 = vsel %vm336, 3e+38, %v296
  %vm345 = vmor %vm297, %vm329
  %vm346 = vmor %vm298, %vm330
  %vm347 = vmor %vm299, %vm331
  %vm348 = vmor %vm300, %vm332
  %vm349 = vmor %vm301, %vm333
  %vm350 = vmor %vm302, %vm334
  %vm351 = vmor %vm303, %vm335
  %vm352 = vmor %vm304, %vm336
  %v353 = vsel %vm168, %v337, inf
  %354 = vmin.xlane.f32.xlu0 %v353
  %v355 = vpop.xlane.xlu0 %354
  %v356 = vsel %vm168, %v338, inf
  %357 = vmin.xlane.f32.xlu0 %v356
  %v358 = vpop.xlane.xlu0 %357
  %v359 = vsel %vm168, %v339, inf
  %360 = vmin.xlane.f32.xlu0 %v359
  %v361 = vpop.xlane.xlu0 %360
  %v362 = vsel %vm168, %v340, inf
  %363 = vmin.xlane.f32.xlu0 %v362
  %v364 = vpop.xlane.xlu0 %363
  %v365 = vsel %vm168, %v341, inf
  %366 = vmin.xlane.f32.xlu0 %v365
  %v367 = vpop.xlane.xlu0 %366
  %v368 = vsel %vm168, %v342, inf
  %369 = vmin.xlane.f32.xlu0 %v368
  %v370 = vpop.xlane.xlu0 %369
  %v371 = vsel %vm168, %v343, inf
  %372 = vmin.xlane.f32.xlu0 %v371
  %v373 = vpop.xlane.xlu0 %372
  %v374 = vsel %vm168, %v344, inf
  %375 = vmin.xlane.f32.xlu0 %v374
  %v376 = vpop.xlane.xlu0 %375
  %vm377 = vcmp.eq.f32.partialorder %v337, %v355
  %vm378 = vcmp.eq.f32.partialorder %v338, %v358
  %vm379 = vcmp.eq.f32.partialorder %v339, %v361
  %vm380 = vcmp.eq.f32.partialorder %v340, %v364
  %vm381 = vcmp.eq.f32.partialorder %v341, %v367
  %vm382 = vcmp.eq.f32.partialorder %v342, %v370
  %vm383 = vcmp.eq.f32.partialorder %v343, %v373
  %vm384 = vcmp.eq.f32.partialorder %v344, %v376
  %v385 = vsel %vm377, 3e+38, %v337
  %v386 = vsel %vm378, 3e+38, %v338
  %v387 = vsel %vm379, 3e+38, %v339
  %v388 = vsel %vm380, 3e+38, %v340
  %v389 = vsel %vm381, 3e+38, %v341
  %v390 = vsel %vm382, 3e+38, %v342
  %v391 = vsel %vm383, 3e+38, %v343
  %v392 = vsel %vm384, 3e+38, %v344
  %vm393 = vmor %vm345, %vm377
  %vm394 = vmor %vm346, %vm378
  %vm395 = vmor %vm347, %vm379
  %vm396 = vmor %vm348, %vm380
  %vm397 = vmor %vm349, %vm381
  %vm398 = vmor %vm350, %vm382
  %vm399 = vmor %vm351, %vm383
  %vm400 = vmor %vm352, %vm384
  %v401 = vsel %vm168, %v385, inf
  %402 = vmin.xlane.f32.xlu0 %v401
  %v403 = vpop.xlane.xlu0 %402
  %v404 = vsel %vm168, %v386, inf
  %405 = vmin.xlane.f32.xlu0 %v404
  %v406 = vpop.xlane.xlu0 %405
  %v407 = vsel %vm168, %v387, inf
  %408 = vmin.xlane.f32.xlu0 %v407
  %v409 = vpop.xlane.xlu0 %408
  %v410 = vsel %vm168, %v388, inf
  %411 = vmin.xlane.f32.xlu0 %v410
  %v412 = vpop.xlane.xlu0 %411
  %v413 = vsel %vm168, %v389, inf
  %414 = vmin.xlane.f32.xlu0 %v413
  %v415 = vpop.xlane.xlu0 %414
  %v416 = vsel %vm168, %v390, inf
  %417 = vmin.xlane.f32.xlu0 %v416
  %v418 = vpop.xlane.xlu0 %417
  %v419 = vsel %vm168, %v391, inf
  %420 = vmin.xlane.f32.xlu0 %v419
  %v421 = vpop.xlane.xlu0 %420
  %v422 = vsel %vm168, %v392, inf
  %423 = vmin.xlane.f32.xlu0 %v422
  %v424 = vpop.xlane.xlu0 %423
  %vm425 = vcmp.eq.f32.partialorder %v385, %v403
  %vm426 = vcmp.eq.f32.partialorder %v386, %v406
  %vm427 = vcmp.eq.f32.partialorder %v387, %v409
  %vm428 = vcmp.eq.f32.partialorder %v388, %v412
  %vm429 = vcmp.eq.f32.partialorder %v389, %v415
  %vm430 = vcmp.eq.f32.partialorder %v390, %v418
  %vm431 = vcmp.eq.f32.partialorder %v391, %v421
  %vm432 = vcmp.eq.f32.partialorder %v392, %v424
  %v433 = vsel %vm425, 3e+38, %v385
  %v434 = vsel %vm426, 3e+38, %v386
  %v435 = vsel %vm427, 3e+38, %v387
  %v436 = vsel %vm428, 3e+38, %v388
  %v437 = vsel %vm429, 3e+38, %v389
  %v438 = vsel %vm430, 3e+38, %v390
  %v439 = vsel %vm431, 3e+38, %v391
  %v440 = vsel %vm432, 3e+38, %v392
  %vm441 = vmor %vm393, %vm425
  %vm442 = vmor %vm394, %vm426
  %vm443 = vmor %vm395, %vm427
  %vm444 = vmor %vm396, %vm428
  %vm445 = vmor %vm397, %vm429
  %vm446 = vmor %vm398, %vm430
  %vm447 = vmor %vm399, %vm431
  %vm448 = vmor %vm400, %vm432
  %v449 = vsel %vm168, %v433, inf
  %450 = vmin.xlane.f32.xlu0 %v449
  %v451 = vpop.xlane.xlu0 %450
  %v452 = vsel %vm168, %v434, inf
  %453 = vmin.xlane.f32.xlu0 %v452
  %v454 = vpop.xlane.xlu0 %453
  %v455 = vsel %vm168, %v435, inf
  %456 = vmin.xlane.f32.xlu0 %v455
  %v457 = vpop.xlane.xlu0 %456
  %v458 = vsel %vm168, %v436, inf
  %459 = vmin.xlane.f32.xlu0 %v458
  %v460 = vpop.xlane.xlu0 %459
  %v461 = vsel %vm168, %v437, inf
  %462 = vmin.xlane.f32.xlu0 %v461
  %v463 = vpop.xlane.xlu0 %462
  %v464 = vsel %vm168, %v438, inf
  %465 = vmin.xlane.f32.xlu0 %v464
  %v466 = vpop.xlane.xlu0 %465
  %v467 = vsel %vm168, %v439, inf
  %468 = vmin.xlane.f32.xlu0 %v467
  %v469 = vpop.xlane.xlu0 %468
  %v470 = vsel %vm168, %v440, inf
  %471 = vmin.xlane.f32.xlu0 %v470
  %v472 = vpop.xlane.xlu0 %471
  %vm473 = vcmp.eq.f32.partialorder %v433, %v451
  %vm474 = vcmp.eq.f32.partialorder %v434, %v454
  %vm475 = vcmp.eq.f32.partialorder %v435, %v457
  %vm476 = vcmp.eq.f32.partialorder %v436, %v460
  %vm477 = vcmp.eq.f32.partialorder %v437, %v463
  %vm478 = vcmp.eq.f32.partialorder %v438, %v466
  %vm479 = vcmp.eq.f32.partialorder %v439, %v469
  %vm480 = vcmp.eq.f32.partialorder %v440, %v472
  %v481 = vsel %vm473, 3e+38, %v433
  %v482 = vsel %vm474, 3e+38, %v434
  %v483 = vsel %vm475, 3e+38, %v435
  %v484 = vsel %vm476, 3e+38, %v436
  %v485 = vsel %vm477, 3e+38, %v437
  %v486 = vsel %vm478, 3e+38, %v438
  %v487 = vsel %vm479, 3e+38, %v439
  %v488 = vsel %vm480, 3e+38, %v440
  %vm489 = vmor %vm441, %vm473
  %vm490 = vmor %vm442, %vm474
  %vm491 = vmor %vm443, %vm475
  %vm492 = vmor %vm444, %vm476
  %vm493 = vmor %vm445, %vm477
  %vm494 = vmor %vm446, %vm478
  %vm495 = vmor %vm447, %vm479
  %vm496 = vmor %vm448, %vm480
  %v497 = vsel %vm168, %v481, inf
  %498 = vmin.xlane.f32.xlu0 %v497
  %v499 = vpop.xlane.xlu0 %498
  %v500 = vsel %vm168, %v482, inf
  %501 = vmin.xlane.f32.xlu0 %v500
  %v502 = vpop.xlane.xlu0 %501
  %v503 = vsel %vm168, %v483, inf
  %504 = vmin.xlane.f32.xlu0 %v503
  %v505 = vpop.xlane.xlu0 %504
  %v506 = vsel %vm168, %v484, inf
  %507 = vmin.xlane.f32.xlu0 %v506
  %v508 = vpop.xlane.xlu0 %507
  %v509 = vsel %vm168, %v485, inf
  %510 = vmin.xlane.f32.xlu0 %v509
  %v511 = vpop.xlane.xlu0 %510
  %v512 = vsel %vm168, %v486, inf
  %513 = vmin.xlane.f32.xlu0 %v512
  %v514 = vpop.xlane.xlu0 %513
  %v515 = vsel %vm168, %v487, inf
  %516 = vmin.xlane.f32.xlu0 %v515
  %v517 = vpop.xlane.xlu0 %516
  %v518 = vsel %vm168, %v488, inf
  %519 = vmin.xlane.f32.xlu0 %v518
  %v520 = vpop.xlane.xlu0 %519
  %vm521 = vcmp.eq.f32.partialorder %v481, %v499
  %vm522 = vcmp.eq.f32.partialorder %v482, %v502
  %vm523 = vcmp.eq.f32.partialorder %v483, %v505
  %vm524 = vcmp.eq.f32.partialorder %v484, %v508
  %vm525 = vcmp.eq.f32.partialorder %v485, %v511
  %vm526 = vcmp.eq.f32.partialorder %v486, %v514
  %vm527 = vcmp.eq.f32.partialorder %v487, %v517
  %vm528 = vcmp.eq.f32.partialorder %v488, %v520
  %v529 = vsel %vm521, 3e+38, %v481
  %v530 = vsel %vm522, 3e+38, %v482
  %v531 = vsel %vm523, 3e+38, %v483
  %v532 = vsel %vm524, 3e+38, %v484
  %v533 = vsel %vm525, 3e+38, %v485
  %v534 = vsel %vm526, 3e+38, %v486
  %v535 = vsel %vm527, 3e+38, %v487
  %v536 = vsel %vm528, 3e+38, %v488
  %vm537 = vmor %vm489, %vm521
  %vm538 = vmor %vm490, %vm522
  %vm539 = vmor %vm491, %vm523
  %vm540 = vmor %vm492, %vm524
  %vm541 = vmor %vm493, %vm525
  %vm542 = vmor %vm494, %vm526
  %vm543 = vmor %vm495, %vm527
  %vm544 = vmor %vm496, %vm528
  %v545 = vsel %vm168, %v529, inf
  %546 = vmin.xlane.f32.xlu0 %v545
  %v547 = vpop.xlane.xlu0 %546
  %v548 = vsel %vm168, %v530, inf
  %549 = vmin.xlane.f32.xlu0 %v548
  %v550 = vpop.xlane.xlu0 %549
  %v551 = vsel %vm168, %v531, inf
  %552 = vmin.xlane.f32.xlu0 %v551
  %v553 = vpop.xlane.xlu0 %552
  %v554 = vsel %vm168, %v532, inf
  %555 = vmin.xlane.f32.xlu0 %v554
  %v556 = vpop.xlane.xlu0 %555
  %v557 = vsel %vm168, %v533, inf
  %558 = vmin.xlane.f32.xlu0 %v557
  %v559 = vpop.xlane.xlu0 %558
  %v560 = vsel %vm168, %v534, inf
  %561 = vmin.xlane.f32.xlu0 %v560
  %v562 = vpop.xlane.xlu0 %561
  %v563 = vsel %vm168, %v535, inf
  %564 = vmin.xlane.f32.xlu0 %v563
  %v565 = vpop.xlane.xlu0 %564
  %v566 = vsel %vm168, %v536, inf
  %567 = vmin.xlane.f32.xlu0 %v566
  %v568 = vpop.xlane.xlu0 %567
  %vm569 = vcmp.eq.f32.partialorder %v529, %v547
  %vm570 = vcmp.eq.f32.partialorder %v530, %v550
  %vm571 = vcmp.eq.f32.partialorder %v531, %v553
  %vm572 = vcmp.eq.f32.partialorder %v532, %v556
  %vm573 = vcmp.eq.f32.partialorder %v533, %v559
  %vm574 = vcmp.eq.f32.partialorder %v534, %v562
  %vm575 = vcmp.eq.f32.partialorder %v535, %v565
  %vm576 = vcmp.eq.f32.partialorder %v536, %v568
  %v577 = vsel %vm569, 3e+38, %v529
  %v578 = vsel %vm570, 3e+38, %v530
  %v579 = vsel %vm571, 3e+38, %v531
  %v580 = vsel %vm572, 3e+38, %v532
  %v581 = vsel %vm573, 3e+38, %v533
  %v582 = vsel %vm574, 3e+38, %v534
  %v583 = vsel %vm575, 3e+38, %v535
  %v584 = vsel %vm576, 3e+38, %v536
  %vm585 = vmor %vm537, %vm569
  %vm586 = vmor %vm538, %vm570
  %vm587 = vmor %vm539, %vm571
  %vm588 = vmor %vm540, %vm572
  %vm589 = vmor %vm541, %vm573
  %vm590 = vmor %vm542, %vm574
  %vm591 = vmor %vm543, %vm575
  %vm592 = vmor %vm544, %vm576
  %v593 = vsel %vm168, %v577, inf
  %594 = vmin.xlane.f32.xlu0 %v593
  %v595 = vpop.xlane.xlu0 %594
  %v596 = vsel %vm168, %v578, inf
  %597 = vmin.xlane.f32.xlu0 %v596
  %v598 = vpop.xlane.xlu0 %597
  %v599 = vsel %vm168, %v579, inf
  %600 = vmin.xlane.f32.xlu0 %v599
  %v601 = vpop.xlane.xlu0 %600
  %v602 = vsel %vm168, %v580, inf
  %603 = vmin.xlane.f32.xlu0 %v602
  %v604 = vpop.xlane.xlu0 %603
  %v605 = vsel %vm168, %v581, inf
  %606 = vmin.xlane.f32.xlu0 %v605
  %v607 = vpop.xlane.xlu0 %606
  %v608 = vsel %vm168, %v582, inf
  %609 = vmin.xlane.f32.xlu0 %v608
  %v610 = vpop.xlane.xlu0 %609
  %v611 = vsel %vm168, %v583, inf
  %612 = vmin.xlane.f32.xlu0 %v611
  %v613 = vpop.xlane.xlu0 %612
  %v614 = vsel %vm168, %v584, inf
  %615 = vmin.xlane.f32.xlu0 %v614
  %v616 = vpop.xlane.xlu0 %615
  %vm617 = vcmp.eq.f32.partialorder %v577, %v595
  %vm618 = vcmp.eq.f32.partialorder %v578, %v598
  %vm619 = vcmp.eq.f32.partialorder %v579, %v601
  %vm620 = vcmp.eq.f32.partialorder %v580, %v604
  %vm621 = vcmp.eq.f32.partialorder %v581, %v607
  %vm622 = vcmp.eq.f32.partialorder %v582, %v610
  %vm623 = vcmp.eq.f32.partialorder %v583, %v613
  %vm624 = vcmp.eq.f32.partialorder %v584, %v616
  %v625 = vsel %vm617, 3e+38, %v577
  %v626 = vsel %vm618, 3e+38, %v578
  %v627 = vsel %vm619, 3e+38, %v579
  %v628 = vsel %vm620, 3e+38, %v580
  %v629 = vsel %vm621, 3e+38, %v581
  %v630 = vsel %vm622, 3e+38, %v582
  %v631 = vsel %vm623, 3e+38, %v583
  %v632 = vsel %vm624, 3e+38, %v584
  %vm633 = vmor %vm585, %vm617
  %vm634 = vmor %vm586, %vm618
  %vm635 = vmor %vm587, %vm619
  %vm636 = vmor %vm588, %vm620
  %vm637 = vmor %vm589, %vm621
  %vm638 = vmor %vm590, %vm622
  %vm639 = vmor %vm591, %vm623
  %vm640 = vmor %vm592, %vm624
  %v641 = vsel %vm168, %v625, inf
  %642 = vmin.xlane.f32.xlu0 %v641
  %v643 = vpop.xlane.xlu0 %642
  %v644 = vsel %vm168, %v626, inf
  %645 = vmin.xlane.f32.xlu0 %v644
  %v646 = vpop.xlane.xlu0 %645
  %v647 = vsel %vm168, %v627, inf
  %648 = vmin.xlane.f32.xlu0 %v647
  %v649 = vpop.xlane.xlu0 %648
  %v650 = vsel %vm168, %v628, inf
  %651 = vmin.xlane.f32.xlu0 %v650
  %v652 = vpop.xlane.xlu0 %651
  %v653 = vsel %vm168, %v629, inf
  %654 = vmin.xlane.f32.xlu0 %v653
  %v655 = vpop.xlane.xlu0 %654
  %v656 = vsel %vm168, %v630, inf
  %657 = vmin.xlane.f32.xlu0 %v656
  %v658 = vpop.xlane.xlu0 %657
  %v659 = vsel %vm168, %v631, inf
  %660 = vmin.xlane.f32.xlu0 %v659
  %v661 = vpop.xlane.xlu0 %660
  %v662 = vsel %vm168, %v632, inf
  %663 = vmin.xlane.f32.xlu0 %v662
  %v664 = vpop.xlane.xlu0 %663
  %vm665 = vcmp.eq.f32.partialorder %v625, %v643
  %vm666 = vcmp.eq.f32.partialorder %v626, %v646
  %vm667 = vcmp.eq.f32.partialorder %v627, %v649
  %vm668 = vcmp.eq.f32.partialorder %v628, %v652
  %vm669 = vcmp.eq.f32.partialorder %v629, %v655
  %vm670 = vcmp.eq.f32.partialorder %v630, %v658
  %vm671 = vcmp.eq.f32.partialorder %v631, %v661
  %vm672 = vcmp.eq.f32.partialorder %v632, %v664
  %v673 = vsel %vm665, 3e+38, %v625
  %v674 = vsel %vm666, 3e+38, %v626
  %v675 = vsel %vm667, 3e+38, %v627
  %v676 = vsel %vm668, 3e+38, %v628
  %v677 = vsel %vm669, 3e+38, %v629
  %v678 = vsel %vm670, 3e+38, %v630
  %v679 = vsel %vm671, 3e+38, %v631
  %v680 = vsel %vm672, 3e+38, %v632
  %vm681 = vmor %vm633, %vm665
  %vm682 = vmor %vm634, %vm666
  %vm683 = vmor %vm635, %vm667
  %vm684 = vmor %vm636, %vm668
  %vm685 = vmor %vm637, %vm669
  %vm686 = vmor %vm638, %vm670
  %vm687 = vmor %vm639, %vm671
  %vm688 = vmor %vm640, %vm672
  %v689 = vsel %vm168, %v673, inf
  %690 = vmin.xlane.f32.xlu0 %v689
  %v691 = vpop.xlane.xlu0 %690
  %v692 = vsel %vm168, %v674, inf
  %693 = vmin.xlane.f32.xlu0 %v692
  %v694 = vpop.xlane.xlu0 %693
  %v695 = vsel %vm168, %v675, inf
  %696 = vmin.xlane.f32.xlu0 %v695
  %v697 = vpop.xlane.xlu0 %696
  %v698 = vsel %vm168, %v676, inf
  %699 = vmin.xlane.f32.xlu0 %v698
  %v700 = vpop.xlane.xlu0 %699
  %v701 = vsel %vm168, %v677, inf
  %702 = vmin.xlane.f32.xlu0 %v701
  %v703 = vpop.xlane.xlu0 %702
  %v704 = vsel %vm168, %v678, inf
  %705 = vmin.xlane.f32.xlu0 %v704
  %v706 = vpop.xlane.xlu0 %705
  %v707 = vsel %vm168, %v679, inf
  %708 = vmin.xlane.f32.xlu0 %v707
  %v709 = vpop.xlane.xlu0 %708
  %v710 = vsel %vm168, %v680, inf
  %711 = vmin.xlane.f32.xlu0 %v710
  %v712 = vpop.xlane.xlu0 %711
  %vm713 = vcmp.eq.f32.partialorder %v673, %v691
  %vm714 = vcmp.eq.f32.partialorder %v674, %v694
  %vm715 = vcmp.eq.f32.partialorder %v675, %v697
  %vm716 = vcmp.eq.f32.partialorder %v676, %v700
  %vm717 = vcmp.eq.f32.partialorder %v677, %v703
  %vm718 = vcmp.eq.f32.partialorder %v678, %v706
  %vm719 = vcmp.eq.f32.partialorder %v679, %v709
  %vm720 = vcmp.eq.f32.partialorder %v680, %v712
  %v721 = vsel %vm713, 3e+38, %v673
  %v722 = vsel %vm714, 3e+38, %v674
  %v723 = vsel %vm715, 3e+38, %v675
  %v724 = vsel %vm716, 3e+38, %v676
  %v725 = vsel %vm717, 3e+38, %v677
  %v726 = vsel %vm718, 3e+38, %v678
  %v727 = vsel %vm719, 3e+38, %v679
  %v728 = vsel %vm720, 3e+38, %v680
  %vm729 = vmor %vm681, %vm713
  %vm730 = vmor %vm682, %vm714
  %vm731 = vmor %vm683, %vm715
  %vm732 = vmor %vm684, %vm716
  %vm733 = vmor %vm685, %vm717
  %vm734 = vmor %vm686, %vm718
  %vm735 = vmor %vm687, %vm719
  %vm736 = vmor %vm688, %vm720
  %v737 = vsel %vm168, %v721, inf
  %738 = vmin.xlane.f32.xlu0 %v737
  %v739 = vpop.xlane.xlu0 %738
  %v740 = vsel %vm168, %v722, inf
  %741 = vmin.xlane.f32.xlu0 %v740
  %v742 = vpop.xlane.xlu0 %741
  %v743 = vsel %vm168, %v723, inf
  %744 = vmin.xlane.f32.xlu0 %v743
  %v745 = vpop.xlane.xlu0 %744
  %v746 = vsel %vm168, %v724, inf
  %747 = vmin.xlane.f32.xlu0 %v746
  %v748 = vpop.xlane.xlu0 %747
  %v749 = vsel %vm168, %v725, inf
  %750 = vmin.xlane.f32.xlu0 %v749
  %v751 = vpop.xlane.xlu0 %750
  %v752 = vsel %vm168, %v726, inf
  %753 = vmin.xlane.f32.xlu0 %v752
  %v754 = vpop.xlane.xlu0 %753
  %v755 = vsel %vm168, %v727, inf
  %756 = vmin.xlane.f32.xlu0 %v755
  %v757 = vpop.xlane.xlu0 %756
  %v758 = vsel %vm168, %v728, inf
  %759 = vmin.xlane.f32.xlu0 %v758
  %v760 = vpop.xlane.xlu0 %759
  %vm761 = vcmp.eq.f32.partialorder %v721, %v739
  %vm762 = vcmp.eq.f32.partialorder %v722, %v742
  %vm763 = vcmp.eq.f32.partialorder %v723, %v745
  %vm764 = vcmp.eq.f32.partialorder %v724, %v748
  %vm765 = vcmp.eq.f32.partialorder %v725, %v751
  %vm766 = vcmp.eq.f32.partialorder %v726, %v754
  %vm767 = vcmp.eq.f32.partialorder %v727, %v757
  %vm768 = vcmp.eq.f32.partialorder %v728, %v760
  %v769 = vsel %vm761, 3e+38, %v721
  %v770 = vsel %vm762, 3e+38, %v722
  %v771 = vsel %vm763, 3e+38, %v723
  %v772 = vsel %vm764, 3e+38, %v724
  %v773 = vsel %vm765, 3e+38, %v725
  %v774 = vsel %vm766, 3e+38, %v726
  %v775 = vsel %vm767, 3e+38, %v727
  %v776 = vsel %vm768, 3e+38, %v728
  %vm777 = vmor %vm729, %vm761
  %vm778 = vmor %vm730, %vm762
  %vm779 = vmor %vm731, %vm763
  %vm780 = vmor %vm732, %vm764
  %vm781 = vmor %vm733, %vm765
  %vm782 = vmor %vm734, %vm766
  %vm783 = vmor %vm735, %vm767
  %vm784 = vmor %vm736, %vm768
  %v785 = vsel %vm168, %v769, inf
  %786 = vmin.xlane.f32.xlu0 %v785
  %v787 = vpop.xlane.xlu0 %786
  %v788 = vsel %vm168, %v770, inf
  %789 = vmin.xlane.f32.xlu0 %v788
  %v790 = vpop.xlane.xlu0 %789
  %v791 = vsel %vm168, %v771, inf
  %792 = vmin.xlane.f32.xlu0 %v791
  %v793 = vpop.xlane.xlu0 %792
  %v794 = vsel %vm168, %v772, inf
  %795 = vmin.xlane.f32.xlu0 %v794
  %v796 = vpop.xlane.xlu0 %795
  %v797 = vsel %vm168, %v773, inf
  %798 = vmin.xlane.f32.xlu0 %v797
  %v799 = vpop.xlane.xlu0 %798
  %v800 = vsel %vm168, %v774, inf
  %801 = vmin.xlane.f32.xlu0 %v800
  %v802 = vpop.xlane.xlu0 %801
  %v803 = vsel %vm168, %v775, inf
  %804 = vmin.xlane.f32.xlu0 %v803
  %v805 = vpop.xlane.xlu0 %804
  %v806 = vsel %vm168, %v776, inf
  %807 = vmin.xlane.f32.xlu0 %v806
  %v808 = vpop.xlane.xlu0 %807
  %vm809 = vcmp.eq.f32.partialorder %v769, %v787
  %vm810 = vcmp.eq.f32.partialorder %v770, %v790
  %vm811 = vcmp.eq.f32.partialorder %v771, %v793
  %vm812 = vcmp.eq.f32.partialorder %v772, %v796
  %vm813 = vcmp.eq.f32.partialorder %v773, %v799
  %vm814 = vcmp.eq.f32.partialorder %v774, %v802
  %vm815 = vcmp.eq.f32.partialorder %v775, %v805
  %vm816 = vcmp.eq.f32.partialorder %v776, %v808
  %v817 = vsel %vm809, 3e+38, %v769
  %v818 = vsel %vm810, 3e+38, %v770
  %v819 = vsel %vm811, 3e+38, %v771
  %v820 = vsel %vm812, 3e+38, %v772
  %v821 = vsel %vm813, 3e+38, %v773
  %v822 = vsel %vm814, 3e+38, %v774
  %v823 = vsel %vm815, 3e+38, %v775
  %v824 = vsel %vm816, 3e+38, %v776
  %vm825 = vmor %vm777, %vm809
  %vm826 = vmor %vm778, %vm810
  %vm827 = vmor %vm779, %vm811
  %vm828 = vmor %vm780, %vm812
  %vm829 = vmor %vm781, %vm813
  %vm830 = vmor %vm782, %vm814
  %vm831 = vmor %vm783, %vm815
  %vm832 = vmor %vm784, %vm816
  %v833 = vsel %vm168, %v817, inf
  %834 = vmin.xlane.f32.xlu0 %v833
  %v835 = vpop.xlane.xlu0 %834
  %v836 = vsel %vm168, %v818, inf
  %837 = vmin.xlane.f32.xlu0 %v836
  %v838 = vpop.xlane.xlu0 %837
  %v839 = vsel %vm168, %v819, inf
  %840 = vmin.xlane.f32.xlu0 %v839
  %v841 = vpop.xlane.xlu0 %840
  %v842 = vsel %vm168, %v820, inf
  %843 = vmin.xlane.f32.xlu0 %v842
  %v844 = vpop.xlane.xlu0 %843
  %v845 = vsel %vm168, %v821, inf
  %846 = vmin.xlane.f32.xlu0 %v845
  %v847 = vpop.xlane.xlu0 %846
  %v848 = vsel %vm168, %v822, inf
  %849 = vmin.xlane.f32.xlu0 %v848
  %v850 = vpop.xlane.xlu0 %849
  %v851 = vsel %vm168, %v823, inf
  %852 = vmin.xlane.f32.xlu0 %v851
  %v853 = vpop.xlane.xlu0 %852
  %v854 = vsel %vm168, %v824, inf
  %855 = vmin.xlane.f32.xlu0 %v854
  %v856 = vpop.xlane.xlu0 %855
  %vm857 = vcmp.eq.f32.partialorder %v817, %v835
  %vm858 = vcmp.eq.f32.partialorder %v818, %v838
  %vm859 = vcmp.eq.f32.partialorder %v819, %v841
  %vm860 = vcmp.eq.f32.partialorder %v820, %v844
  %vm861 = vcmp.eq.f32.partialorder %v821, %v847
  %vm862 = vcmp.eq.f32.partialorder %v822, %v850
  %vm863 = vcmp.eq.f32.partialorder %v823, %v853
  %vm864 = vcmp.eq.f32.partialorder %v824, %v856
  %v865 = vsel %vm857, 3e+38, %v817
  %v866 = vsel %vm858, 3e+38, %v818
  %v867 = vsel %vm859, 3e+38, %v819
  %v868 = vsel %vm860, 3e+38, %v820
  %v869 = vsel %vm861, 3e+38, %v821
  %v870 = vsel %vm862, 3e+38, %v822
  %v871 = vsel %vm863, 3e+38, %v823
  %v872 = vsel %vm864, 3e+38, %v824
  %vm873 = vmor %vm825, %vm857
  %vm874 = vmor %vm826, %vm858
  %vm875 = vmor %vm827, %vm859
  %vm876 = vmor %vm828, %vm860
  %vm877 = vmor %vm829, %vm861
  %vm878 = vmor %vm830, %vm862
  %vm879 = vmor %vm831, %vm863
  %vm880 = vmor %vm832, %vm864
  %v881 = vsel %vm168, %v865, inf
  %882 = vmin.xlane.f32.xlu0 %v881
  %v883 = vpop.xlane.xlu0 %882
  %v884 = vsel %vm168, %v866, inf
  %885 = vmin.xlane.f32.xlu0 %v884
  %v886 = vpop.xlane.xlu0 %885
  %v887 = vsel %vm168, %v867, inf
  %888 = vmin.xlane.f32.xlu0 %v887
  %v889 = vpop.xlane.xlu0 %888
  %v890 = vsel %vm168, %v868, inf
  %891 = vmin.xlane.f32.xlu0 %v890
  %v892 = vpop.xlane.xlu0 %891
  %v893 = vsel %vm168, %v869, inf
  %894 = vmin.xlane.f32.xlu0 %v893
  %v895 = vpop.xlane.xlu0 %894
  %v896 = vsel %vm168, %v870, inf
  %897 = vmin.xlane.f32.xlu0 %v896
  %v898 = vpop.xlane.xlu0 %897
  %v899 = vsel %vm168, %v871, inf
  %900 = vmin.xlane.f32.xlu0 %v899
  %v901 = vpop.xlane.xlu0 %900
  %v902 = vsel %vm168, %v872, inf
  %903 = vmin.xlane.f32.xlu0 %v902
  %v904 = vpop.xlane.xlu0 %903
  %vm905 = vcmp.eq.f32.partialorder %v865, %v883
  %vm906 = vcmp.eq.f32.partialorder %v866, %v886
  %vm907 = vcmp.eq.f32.partialorder %v867, %v889
  %vm908 = vcmp.eq.f32.partialorder %v868, %v892
  %vm909 = vcmp.eq.f32.partialorder %v869, %v895
  %vm910 = vcmp.eq.f32.partialorder %v870, %v898
  %vm911 = vcmp.eq.f32.partialorder %v871, %v901
  %vm912 = vcmp.eq.f32.partialorder %v872, %v904
  %vm913 = vmor %vm873, %vm905
  %vm914 = vmor %vm874, %vm906
  %vm915 = vmor %vm875, %vm907
  %vm916 = vmor %vm876, %vm908
  %vm917 = vmor %vm877, %vm909
  %vm918 = vmor %vm878, %vm910
  %vm919 = vmor %vm879, %vm911
  %vm920 = vmor %vm880, %vm912
  %v921 = vsel %vm913, 1, 0
  %v922 = vsel %vm914, 1, 0
  %v923 = vsel %vm915, 1, 0
  %v924 = vsel %vm916, 1, 0
  %v925 = vsel %vm917, 1, 0
  %v926 = vsel %vm918, 1, 0
  %v927 = vsel %vm919, 1, 0
  %v928 = vsel %vm920, 1, 0
  %v929 = vcvt.s32.f32 %v921
  %v930 = vcvt.s32.f32 %v922
  %v931 = vcvt.s32.f32 %v923
  %v932 = vcvt.s32.f32 %v924
  %v933 = vcvt.s32.f32 %v925
  %v934 = vcvt.s32.f32 %v926
  %v935 = vcvt.s32.f32 %v927
  %v936 = vcvt.s32.f32 %v928
  %v938 = vsel %vm168, %v929, 0
  %v941 = vsel %vm168, %v930, 0
  %v944 = vsel %vm168, %v931, 0
  %v947 = vsel %vm168, %v932, 0
  %v950 = vsel %vm168, %v933, 0
  %v953 = vsel %vm168, %v934, 0
  %v956 = vsel %vm168, %v935, 0
  %v959 = vsel %vm168, %v936, 0
  %961 = vmatpush.msra.mxu0 0.0
  %962 = vmatpush.msra.mxu0 0.0
  %963 = vmatpush.msra.mxu0 0.0
  %964 = vmatpush.msra.mxu0 0.0
  %965 = vmatpush.msra.mxu0 0.0
  %966 = vmatpush.msra.mxu0 0.0
  %967 = vmatpush.msra.mxu0 0.0
  %968 = vmatpush.msra.mxu0 0.0
  %969 = vmatpush.msra.mxu0 %v43
  %970 = vmatpush.msra.mxu0 %v42
  %971 = vmatpush.msra.mxu0 %v41
  %972 = vmatpush.msra.mxu0 %v40
  %973 = vmatpush.msra.mxu0 %v39
  %974 = vmatpush.msra.mxu0 %v38
  %975 = vmatpush.msra.mxu0 %v37
  %976 = vmatpush.msra.mxu0 %v36
  %977 = vmatmul.f32.gmra.mxu0 %v938
  %v978 = vpop.f32.mrf.mxu0
  %v979 = vadd.f32 0.0, %v978
  %980 = vmatmul.f32.gmra.mxu0 %v941
  %v981 = vpop.f32.mrf.mxu0
  %v982 = vadd.f32 0.0, %v981
  %983 = vmatmul.f32.gmra.mxu0 %v944
  %v984 = vpop.f32.mrf.mxu0
  %v985 = vadd.f32 0.0, %v984
  %986 = vmatmul.f32.gmra.mxu0 %v947
  %v987 = vpop.f32.mrf.mxu0
  %v988 = vadd.f32 0.0, %v987
  %989 = vmatmul.f32.gmra.mxu0 %v950
  %v990 = vpop.f32.mrf.mxu0
  %v991 = vadd.f32 0.0, %v990
  %992 = vmatmul.f32.gmra.mxu0 %v953
  %v993 = vpop.f32.mrf.mxu0
  %v994 = vadd.f32 0.0, %v993
  %995 = vmatmul.f32.gmra.mxu0 %v956
  %v996 = vpop.f32.mrf.mxu0
  %v997 = vadd.f32 0.0, %v996
  %998 = vmatmul.f32.gmra.mxu0 %v959
  %v999 = vpop.f32.mrf.mxu0
  %v1000 = vadd.f32 0.0, %v999
  %1001 = vdwg.mxu0
  %v1002 = vmul.f32 %v979, 0.0625
  %v1003 = vmul.f32 %v982, 0.0625
  %v1004 = vmul.f32 %v985, 0.0625
  %v1005 = vmul.f32 %v988, 0.0625
  %v1006 = vmul.f32 %v991, 0.0625
  %v1007 = vmul.f32 %v994, 0.0625
  %v1008 = vmul.f32 %v997, 0.0625
  %v1009 = vmul.f32 %v1000, 0.0625
  %1011 = vset.pattern.permute.xlu0 0
  %1012 = vperm.xlu0 %1011, %v1002
  %v1013 = vpop.permute.xlu0 %1012
  %1016 = vset.pattern.permute.xlu0 0
  %1017 = vperm.xlu0 %1016, %v1003
  %v1018 = vpop.permute.xlu0 %1017
  %1021 = vset.pattern.permute.xlu0 0
  %1022 = vperm.xlu0 %1021, %v1004
  %v1023 = vpop.permute.xlu0 %1022
  %1026 = vset.pattern.permute.xlu0 0
  %1027 = vperm.xlu0 %1026, %v1005
  %v1028 = vpop.permute.xlu0 %1027
  %1031 = vset.pattern.permute.xlu0 0
  %1032 = vperm.xlu0 %1031, %v1006
  %v1033 = vpop.permute.xlu0 %1032
  %1036 = vset.pattern.permute.xlu0 0
  %1037 = vperm.xlu0 %1036, %v1007
  %v1038 = vpop.permute.xlu0 %1037
  %1041 = vset.pattern.permute.xlu0 0
  %1042 = vperm.xlu0 %1041, %v1008
  %v1043 = vpop.permute.xlu0 %1042
  %1046 = vset.pattern.permute.xlu0 0
  %1047 = vperm.xlu0 %1046, %v1009
  %v1048 = vpop.permute.xlu0 %1047
  %v1050 = vmul.f32 %v1013, %v1002
  %v1051 = vmul.f32 %v1018, %v1003
  %v1052 = vmul.f32 %v1023, %v1004
  %v1053 = vmul.f32 %v1028, %v1005
  %v1054 = vmul.f32 %v1033, %v1006
  %v1055 = vmul.f32 %v1038, %v1007
  %v1056 = vmul.f32 %v1043, %v1008
  %v1057 = vmul.f32 %v1048, %v1009
  %1058 = vset.pattern.permute.xlu0 1
  %1059 = vperm.xlu0 %1058, %v1002
  %v1060 = vpop.permute.xlu0 %1059
  %1062 = vset.pattern.permute.xlu0 1
  %1063 = vperm.xlu0 %1062, %v1003
  %v1064 = vpop.permute.xlu0 %1063
  %1066 = vset.pattern.permute.xlu0 1
  %1067 = vperm.xlu0 %1066, %v1004
  %v1068 = vpop.permute.xlu0 %1067
  %1070 = vset.pattern.permute.xlu0 1
  %1071 = vperm.xlu0 %1070, %v1005
  %v1072 = vpop.permute.xlu0 %1071
  %1074 = vset.pattern.permute.xlu0 1
  %1075 = vperm.xlu0 %1074, %v1006
  %v1076 = vpop.permute.xlu0 %1075
  %1078 = vset.pattern.permute.xlu0 1
  %1079 = vperm.xlu0 %1078, %v1007
  %v1080 = vpop.permute.xlu0 %1079
  %1082 = vset.pattern.permute.xlu0 1
  %1083 = vperm.xlu0 %1082, %v1008
  %v1084 = vpop.permute.xlu0 %1083
  %1086 = vset.pattern.permute.xlu0 1
  %1087 = vperm.xlu0 %1086, %v1009
  %v1088 = vpop.permute.xlu0 %1087
  %v1090 = vmul.f32 %v1060, %v1002
  %v1091 = vmul.f32 %v1064, %v1003
  %v1092 = vmul.f32 %v1068, %v1004
  %v1093 = vmul.f32 %v1072, %v1005
  %v1094 = vmul.f32 %v1076, %v1006
  %v1095 = vmul.f32 %v1080, %v1007
  %v1096 = vmul.f32 %v1084, %v1008
  %v1097 = vmul.f32 %v1088, %v1009
  %1098 = vset.pattern.permute.xlu0 2
  %1099 = vperm.xlu0 %1098, %v1002
  %v1100 = vpop.permute.xlu0 %1099
  %1102 = vset.pattern.permute.xlu0 2
  %1103 = vperm.xlu0 %1102, %v1003
  %v1104 = vpop.permute.xlu0 %1103
  %1106 = vset.pattern.permute.xlu0 2
  %1107 = vperm.xlu0 %1106, %v1004
  %v1108 = vpop.permute.xlu0 %1107
  %1110 = vset.pattern.permute.xlu0 2
  %1111 = vperm.xlu0 %1110, %v1005
  %v1112 = vpop.permute.xlu0 %1111
  %1114 = vset.pattern.permute.xlu0 2
  %1115 = vperm.xlu0 %1114, %v1006
  %v1116 = vpop.permute.xlu0 %1115
  %1118 = vset.pattern.permute.xlu0 2
  %1119 = vperm.xlu0 %1118, %v1007
  %v1120 = vpop.permute.xlu0 %1119
  %1122 = vset.pattern.permute.xlu0 2
  %1123 = vperm.xlu0 %1122, %v1008
  %v1124 = vpop.permute.xlu0 %1123
  %1126 = vset.pattern.permute.xlu0 2
  %1127 = vperm.xlu0 %1126, %v1009
  %v1128 = vpop.permute.xlu0 %1127
  %v1130 = vmul.f32 %v1100, %v1002
  %v1131 = vmul.f32 %v1104, %v1003
  %v1132 = vmul.f32 %v1108, %v1004
  %v1133 = vmul.f32 %v1112, %v1005
  %v1134 = vmul.f32 %v1116, %v1006
  %v1135 = vmul.f32 %v1120, %v1007
  %v1136 = vmul.f32 %v1124, %v1008
  %v1137 = vmul.f32 %v1128, %v1009
  %1146 = vrot.lane.b32.xlu0 %v1090, 3
  %v1147 = vpop.permute.xlu0 %1146
  %1148 = vrot.lane.b32.xlu0 %v1091, 3
  %v1149 = vpop.permute.xlu0 %1148
  %1150 = vrot.lane.b32.xlu0 %v1092, 3
  %v1151 = vpop.permute.xlu0 %1150
  %1152 = vrot.lane.b32.xlu0 %v1093, 3
  %v1153 = vpop.permute.xlu0 %1152
  %1154 = vrot.lane.b32.xlu0 %v1094, 3
  %v1155 = vpop.permute.xlu0 %1154
  %1156 = vrot.lane.b32.xlu0 %v1095, 3
  %v1157 = vpop.permute.xlu0 %1156
  %1158 = vrot.lane.b32.xlu0 %v1096, 3
  %v1159 = vpop.permute.xlu0 %1158
  %1160 = vrot.lane.b32.xlu0 %v1097, 3
  %v1161 = vpop.permute.xlu0 %1160
  %1178 = vrot.lane.b32.xlu0 %v1130, 6
  %v1179 = vpop.permute.xlu0 %1178
  %1180 = vrot.lane.b32.xlu0 %v1131, 6
  %v1181 = vpop.permute.xlu0 %1180
  %1182 = vrot.lane.b32.xlu0 %v1132, 6
  %v1183 = vpop.permute.xlu0 %1182
  %1184 = vrot.lane.b32.xlu0 %v1133, 6
  %v1185 = vpop.permute.xlu0 %1184
  %1186 = vrot.lane.b32.xlu0 %v1134, 6
  %v1187 = vpop.permute.xlu0 %1186
  %1188 = vrot.lane.b32.xlu0 %v1135, 6
  %v1189 = vpop.permute.xlu0 %1188
  %1190 = vrot.lane.b32.xlu0 %v1136, 6
  %v1191 = vpop.permute.xlu0 %1190
  %1192 = vrot.lane.b32.xlu0 %v1137, 6
  %v1193 = vpop.permute.xlu0 %1192
  %vm1202 = vcmask 23552
  %v1203 = vsel %vm1202, %v1050, %v1147
  %v1204 = vsel %vm1202, %v1051, %v1149
  %v1205 = vsel %vm1202, %v1052, %v1151
  %v1206 = vsel %vm1202, %v1053, %v1153
  %v1207 = vsel %vm1202, %v1054, %v1155
  %v1208 = vsel %vm1202, %v1055, %v1157
  %v1209 = vsel %vm1202, %v1056, %v1159
  %v1210 = vsel %vm1202, %v1057, %v1161
  %vm1211 = vcmask 48128
  %v1212 = vsel %vm1211, %v1203, %v1179
  %v1213 = vsel %vm1211, %v1204, %v1181
  %v1214 = vsel %vm1211, %v1205, %v1183
  %v1215 = vsel %vm1211, %v1206, %v1185
  %v1216 = vsel %vm1211, %v1207, %v1187
  %v1217 = vsel %vm1211, %v1208, %v1189
  %v1218 = vsel %vm1211, %v1209, %v1191
  %v1219 = vsel %vm1211, %v1210, %v1193
  %v1220 = vmul.f32 %v1212, 16.0
  %v1221 = vmul.f32 %v1213, 16.0
  %v1222 = vmul.f32 %v1214, 16.0
  %v1223 = vmul.f32 %v1215, 16.0
  %v1224 = vmul.f32 %v1216, 16.0
  %v1225 = vmul.f32 %v1217, 16.0
  %v1226 = vmul.f32 %v1218, 16.0
  %v1227 = vmul.f32 %v1219, 16.0
  %1236 = vrot.lane.b32.xlu0 %v1220, 3
  %v1237 = vpop.permute.xlu0 %1236
  %1238 = vrot.lane.b32.xlu0 %v1221, 3
  %v1239 = vpop.permute.xlu0 %1238
  %1240 = vrot.lane.b32.xlu0 %v1222, 3
  %v1241 = vpop.permute.xlu0 %1240
  %1242 = vrot.lane.b32.xlu0 %v1223, 3
  %v1243 = vpop.permute.xlu0 %1242
  %1244 = vrot.lane.b32.xlu0 %v1224, 3
  %v1245 = vpop.permute.xlu0 %1244
  %1246 = vrot.lane.b32.xlu0 %v1225, 3
  %v1247 = vpop.permute.xlu0 %1246
  %1248 = vrot.lane.b32.xlu0 %v1226, 3
  %v1249 = vpop.permute.xlu0 %1248
  %1250 = vrot.lane.b32.xlu0 %v1227, 3
  %v1251 = vpop.permute.xlu0 %1250
  %v1260 = vsub.f32 %v979, %v1237
  %v1261 = vsub.f32 %v982, %v1239
  %v1262 = vsub.f32 %v985, %v1241
  %v1263 = vsub.f32 %v988, %v1243
  %v1264 = vsub.f32 %v991, %v1245
  %v1265 = vsub.f32 %v994, %v1247
  %v1266 = vsub.f32 %v997, %v1249
  %v1267 = vsub.f32 %v1000, %v1251
  %v1268 = vsel %vm1202, %v36, %v1260
  %v1269 = vsel %vm1202, %v37, %v1261
  %v1270 = vsel %vm1202, %v38, %v1262
  %v1271 = vsel %vm1202, %v39, %v1263
  %v1272 = vsel %vm1202, %v40, %v1264
  %v1273 = vsel %vm1202, %v41, %v1265
  %v1274 = vsel %vm1202, %v42, %v1266
  %v1275 = vsel %vm1202, %v43, %v1267
  %v1276 = vld [vmem:[%s3] sm:$0xff]
  %v1277 = vld [vmem:[%s3 + $0x10] sm:$0xf]
  %v1278 = vld [vmem:[%s4] sm:$0x1]
  %v1279 = vperm.slane %v1278, 0
  %vm1280 = vcmask 97280
  %v1282 = vsel %vm1280, %v1268, 0
  %v1285 = vsel %vm1280, %v1269, 0
  %v1288 = vsel %vm1280, %v1270, 0
  %v1291 = vsel %vm1280, %v1271, 0
  %v1294 = vsel %vm1280, %v1272, 0
  %v1297 = vsel %vm1280, %v1273, 0
  %v1300 = vsel %vm1280, %v1274, 0
  %v1303 = vsel %vm1280, %v1275, 0
  %vm1305 = vcmask 1043456
  %v1307 = vsel %vm1305, %v1277, 0
  %1309 = vmatpush.msra.mxu0 0.0
  %1310 = vmatpush.msra.mxu0 0.0
  %1311 = vmatpush.msra.mxu0 0.0
  %1312 = vmatpush.msra.mxu0 0.0
  %1313 = vmatpush.msra.mxu0 0.0
  %1314 = vmatpush.msra.mxu0 0.0
  %1315 = vmatpush.msra.mxu0 0.0
  %1316 = vmatpush.msra.mxu0 0.0
  %1317 = vmatpush.msra.mxu0 0.0
  %1318 = vmatpush.msra.mxu0 0.0
  %1319 = vmatpush.msra.mxu0 0.0
  %1320 = vmatpush.msra.mxu0 0.0
  %1321 = vmatpush.msra.mxu0 0.0
  %1322 = vmatpush.msra.mxu0 0.0
  %1323 = vmatpush.msra.mxu0 %v1307
  %1324 = vmatpush.msra.mxu0 %v1276
  %1325 = vmatmul.f32.gmra.mxu0 %v1282
  %v1326 = vpop.f32.mrf.mxu0
  %v1327 = vadd.f32 %v1279, %v1326
  %1328 = vmatmul.f32.gmra.mxu0 %v1285
  %v1329 = vpop.f32.mrf.mxu0
  %v1330 = vadd.f32 %v1279, %v1329
  %1331 = vmatmul.f32.gmra.mxu0 %v1288
  %v1332 = vpop.f32.mrf.mxu0
  %v1333 = vadd.f32 %v1279, %v1332
  %1334 = vmatmul.f32.gmra.mxu0 %v1291
  %v1335 = vpop.f32.mrf.mxu0
  %v1336 = vadd.f32 %v1279, %v1335
  %1337 = vmatmul.f32.gmra.mxu0 %v1294
  %v1338 = vpop.f32.mrf.mxu0
  %v1339 = vadd.f32 %v1279, %v1338
  %1340 = vmatmul.f32.gmra.mxu0 %v1297
  %v1341 = vpop.f32.mrf.mxu0
  %v1342 = vadd.f32 %v1279, %v1341
  %1343 = vmatmul.f32.gmra.mxu0 %v1300
  %v1344 = vpop.f32.mrf.mxu0
  %v1345 = vadd.f32 %v1279, %v1344
  %1346 = vmatmul.f32.gmra.mxu0 %v1303
  %v1347 = vpop.f32.mrf.mxu0
  %v1348 = vadd.f32 %v1279, %v1347
  %1349 = vdwg.mxu0
  %v1350 = vmax.f32 %v1327, 0.0
  %v1351 = vmax.f32 %v1330, 0.0
  %v1352 = vmax.f32 %v1333, 0.0
  %v1353 = vmax.f32 %v1336, 0.0
  %v1354 = vmax.f32 %v1339, 0.0
  %v1355 = vmax.f32 %v1342, 0.0
  %v1356 = vmax.f32 %v1345, 0.0
  %v1357 = vmax.f32 %v1348, 0.0
  %v1358 = vld [vmem:[%s3] sm:$0xff]
  %v1359 = vld [vmem:[%s3 + $0x10] sm:$0xff]
  %v1360 = vld [vmem:[%s3 + $0x20] sm:$0xff]
  %v1361 = vld [vmem:[%s3 + $0x30] sm:$0xff]
  %v1362 = vld [vmem:[%s4 + $0x1] sm:$0x1]
  %v1363 = vperm.slane %v1362, 0
  %1368 = vrot.lane.b32.xlu0 %v1358, 96
  %v1369 = vpop.permute.xlu0 %1368
  %1370 = vrot.lane.b32.xlu0 %v1359, 96
  %v1371 = vpop.permute.xlu0 %1370
  %1372 = vrot.lane.b32.xlu0 %v1360, 96
  %v1373 = vpop.permute.xlu0 %1372
  %1374 = vrot.lane.b32.xlu0 %v1361, 96
  %v1375 = vpop.permute.xlu0 %1374
  %vm1380 = vcmask 261120
  %v1382 = vsel %vm1380, %v1350, 0
  %v1385 = vsel %vm1380, %v1351, 0
  %v1388 = vsel %vm1380, %v1352, 0
  %v1391 = vsel %vm1380, %v1353, 0
  %v1394 = vsel %vm1380, %v1354, 0
  %v1397 = vsel %vm1380, %v1355, 0
  %v1400 = vsel %vm1380, %v1356, 0
  %v1403 = vsel %vm1380, %v1357, 0
  %1405 = vmatpush.msra.mxu0 0.0
  %1406 = vmatpush.msra.mxu0 0.0
  %1407 = vmatpush.msra.mxu0 0.0
  %1408 = vmatpush.msra.mxu0 0.0
  %1409 = vmatpush.msra.mxu0 0.0
  %1410 = vmatpush.msra.mxu0 0.0
  %1411 = vmatpush.msra.mxu0 0.0
  %1412 = vmatpush.msra.mxu0 0.0
  %1413 = vmatpush.msra.mxu0 0.0
  %1414 = vmatpush.msra.mxu0 0.0
  %1415 = vmatpush.msra.mxu0 0.0
  %1416 = vmatpush.msra.mxu0 0.0
  %1417 = vmatpush.msra.mxu0 %v1375
  %1418 = vmatpush.msra.mxu0 %v1373
  %1419 = vmatpush.msra.mxu0 %v1371
  %1420 = vmatpush.msra.mxu0 %v1369
  %1421 = vmatmul.f32.gmra.mxu0 %v1382
  %v1422 = vpop.f32.mrf.mxu0
  %v1423 = vadd.f32 %v1363, %v1422
  %1424 = vmatmul.f32.gmra.mxu0 %v1385
  %v1425 = vpop.f32.mrf.mxu0
  %v1426 = vadd.f32 %v1363, %v1425
  %1427 = vmatmul.f32.gmra.mxu0 %v1388
  %v1428 = vpop.f32.mrf.mxu0
  %v1429 = vadd.f32 %v1363, %v1428
  %1430 = vmatmul.f32.gmra.mxu0 %v1391
  %v1431 = vpop.f32.mrf.mxu0
  %v1432 = vadd.f32 %v1363, %v1431
  %1433 = vmatmul.f32.gmra.mxu0 %v1394
  %v1434 = vpop.f32.mrf.mxu0
  %v1435 = vadd.f32 %v1363, %v1434
  %1436 = vmatmul.f32.gmra.mxu0 %v1397
  %v1437 = vpop.f32.mrf.mxu0
  %v1438 = vadd.f32 %v1363, %v1437
  %1439 = vmatmul.f32.gmra.mxu0 %v1400
  %v1440 = vpop.f32.mrf.mxu0
  %v1441 = vadd.f32 %v1363, %v1440
  %1442 = vmatmul.f32.gmra.mxu0 %v1403
  %v1443 = vpop.f32.mrf.mxu0
  %v1444 = vadd.f32 %v1363, %v1443
  %1445 = vdwg.mxu0
  %v1446 = vmax.f32 %v1423, 0.0
  %v1447 = vmax.f32 %v1426, 0.0
  %v1448 = vmax.f32 %v1429, 0.0
  %v1449 = vmax.f32 %v1432, 0.0
  %v1450 = vmax.f32 %v1435, 0.0
  %v1451 = vmax.f32 %v1438, 0.0
  %v1452 = vmax.f32 %v1441, 0.0
  %v1453 = vmax.f32 %v1444, 0.0
  %v1454 = vld [vmem:[%s4 + $0x2] sm:$0x1]
  %v1455 = vperm.slane %v1454, 0
  %1456 = vrot.lane.b32.xlu0 %v1358, 64
  %v1457 = vpop.permute.xlu0 %1456
  %1458 = vrot.lane.b32.xlu0 %v1359, 64
  %v1459 = vpop.permute.xlu0 %1458
  %1460 = vrot.lane.b32.xlu0 %v1360, 64
  %v1461 = vpop.permute.xlu0 %1460
  %1462 = vrot.lane.b32.xlu0 %v1361, 64
  %v1463 = vpop.permute.xlu0 %1462
  %v1469 = vsel %vm1380, %v1446, 0
  %v1472 = vsel %vm1380, %v1447, 0
  %v1475 = vsel %vm1380, %v1448, 0
  %v1478 = vsel %vm1380, %v1449, 0
  %v1481 = vsel %vm1380, %v1450, 0
  %v1484 = vsel %vm1380, %v1451, 0
  %v1487 = vsel %vm1380, %v1452, 0
  %v1490 = vsel %vm1380, %v1453, 0
  %1492 = vmatpush.msra.mxu0 0.0
  %1493 = vmatpush.msra.mxu0 0.0
  %1494 = vmatpush.msra.mxu0 0.0
  %1495 = vmatpush.msra.mxu0 0.0
  %1496 = vmatpush.msra.mxu0 0.0
  %1497 = vmatpush.msra.mxu0 0.0
  %1498 = vmatpush.msra.mxu0 0.0
  %1499 = vmatpush.msra.mxu0 0.0
  %1500 = vmatpush.msra.mxu0 0.0
  %1501 = vmatpush.msra.mxu0 0.0
  %1502 = vmatpush.msra.mxu0 0.0
  %1503 = vmatpush.msra.mxu0 0.0
  %1504 = vmatpush.msra.mxu0 %v1463
  %1505 = vmatpush.msra.mxu0 %v1461
  %1506 = vmatpush.msra.mxu0 %v1459
  %1507 = vmatpush.msra.mxu0 %v1457
  %1508 = vmatmul.f32.gmra.mxu0 %v1469
  %v1509 = vpop.f32.mrf.mxu0
  %v1510 = vadd.f32 %v1455, %v1509
  %1511 = vmatmul.f32.gmra.mxu0 %v1472
  %v1512 = vpop.f32.mrf.mxu0
  %v1513 = vadd.f32 %v1455, %v1512
  %1514 = vmatmul.f32.gmra.mxu0 %v1475
  %v1515 = vpop.f32.mrf.mxu0
  %v1516 = vadd.f32 %v1455, %v1515
  %1517 = vmatmul.f32.gmra.mxu0 %v1478
  %v1518 = vpop.f32.mrf.mxu0
  %v1519 = vadd.f32 %v1455, %v1518
  %1520 = vmatmul.f32.gmra.mxu0 %v1481
  %v1521 = vpop.f32.mrf.mxu0
  %v1522 = vadd.f32 %v1455, %v1521
  %1523 = vmatmul.f32.gmra.mxu0 %v1484
  %v1524 = vpop.f32.mrf.mxu0
  %v1525 = vadd.f32 %v1455, %v1524
  %1526 = vmatmul.f32.gmra.mxu0 %v1487
  %v1527 = vpop.f32.mrf.mxu0
  %v1528 = vadd.f32 %v1455, %v1527
  %1529 = vmatmul.f32.gmra.mxu0 %v1490
  %v1530 = vpop.f32.mrf.mxu0
  %v1531 = vadd.f32 %v1455, %v1530
  %1532 = vdwg.mxu0
  %v1533 = vmax.f32 %v1510, 0.0
  %v1534 = vmax.f32 %v1513, 0.0
  %v1535 = vmax.f32 %v1516, 0.0
  %v1536 = vmax.f32 %v1519, 0.0
  %v1537 = vmax.f32 %v1522, 0.0
  %v1538 = vmax.f32 %v1525, 0.0
  %v1539 = vmax.f32 %v1528, 0.0
  %v1540 = vmax.f32 %v1531, 0.0
  %v1541 = vsel %vm1380, %v1533, -inf
  %v1542 = vsel %vm1380, %v1534, -inf
  %v1543 = vsel %vm1380, %v1535, -inf
  %v1544 = vsel %vm1380, %v1536, -inf
  %v1545 = vmax.f32 %v1541, %v1542
  %v1546 = vmax.f32 %v1543, %v1544
  %v1547 = vmax.f32 %v1545, %v1546
  %v1548 = vrot.slane %v1547, 4
  %v1549 = vmax.f32 %v1547, %v1548
  %v1550 = vrot.slane %v1549, 2
  %v1551 = vmax.f32 %v1549, %v1550
  %v1552 = vrot.slane %v1551, 1
  %v1553 = vmax.f32 %v1551, %v1552
  %v1554 = vsel %vm1380, %v1537, -inf
  %v1555 = vsel %vm1380, %v1538, -inf
  %v1556 = vsel %vm1380, %v1539, -inf
  %v1557 = vsel %vm1380, %v1540, -inf
  %v1558 = vmax.f32 %v1554, %v1555
  %v1559 = vmax.f32 %v1556, %v1557
  %v1560 = vmax.f32 %v1558, %v1559
  %v1561 = vrot.slane %v1560, 4
  %v1562 = vmax.f32 %v1560, %v1561
  %v1563 = vrot.slane %v1562, 2
  %v1564 = vmax.f32 %v1562, %v1563
  %v1565 = vrot.slane %v1564, 1
  %v1566 = vmax.f32 %v1564, %v1565
  %vm1567 = vcmask 1040384
  %v1568 = vsel %vm1567, %v1553, %v1566
  %vm1569 = vcmask 1041408
  %v1570 = vsel %vm1569, %v1568, 0.0
  %v1571 = vld [vmem:[%s4 + $0x3] sm:$0x1]
  %v1572 = vperm.slane %v1571, 0
  %1573 = vrot.lane.b32.xlu0 %v1358, 32
  %v1574 = vpop.permute.xlu0 %1573
  %1575 = vrot.lane.b32.xlu0 %v1359, 32
  %v1576 = vpop.permute.xlu0 %1575
  %1577 = vrot.lane.b32.xlu0 %v1360, 32
  %v1578 = vpop.permute.xlu0 %1577
  %1579 = vrot.lane.b32.xlu0 %v1361, 32
  %v1580 = vpop.permute.xlu0 %1579
  %v1586 = vsel %vm1380, %v1570, 0
  %1588 = vmatpush.msra.mxu0 0.0
  %1589 = vmatpush.msra.mxu0 0.0
  %1590 = vmatpush.msra.mxu0 0.0
  %1591 = vmatpush.msra.mxu0 0.0
  %1592 = vmatpush.msra.mxu0 0.0
  %1593 = vmatpush.msra.mxu0 0.0
  %1594 = vmatpush.msra.mxu0 0.0
  %1595 = vmatpush.msra.mxu0 0.0
  %1596 = vmatpush.msra.mxu0 0.0
  %1597 = vmatpush.msra.mxu0 0.0
  %1598 = vmatpush.msra.mxu0 0.0
  %1599 = vmatpush.msra.mxu0 0.0
  %1600 = vmatpush.msra.mxu0 %v1580
  %1601 = vmatpush.msra.mxu0 %v1578
  %1602 = vmatpush.msra.mxu0 %v1576
  %1603 = vmatpush.msra.mxu0 %v1574
  %1604 = vmatmul.f32.gmra.mxu0 %v1586
  %v1605 = vpop.f32.mrf.mxu0
  %v1606 = vadd.f32 %v1572, %v1605
  %1607 = vdwg.mxu0
  %v1608 = vmax.f32 %v1606, 0.0
  %v1609 = vld [vmem:[%s3 + $0x10] sm:$0xff]
  %v1610 = vld [vmem:[%s4 + $0x4] sm:$0x1]
  %v1611 = vperm.slane %v1610, 0
  %1614 = vrot.lane.b32.xlu0 %v1276, 16
  %v1615 = vpop.permute.xlu0 %1614
  %1616 = vrot.lane.b32.xlu0 %v1609, 16
  %v1617 = vpop.permute.xlu0 %1616
  %vm1620 = vcmask 130048
  %v1622 = vsel %vm1620, %v1608, 0
  %1624 = vmatpush.msra.mxu0 0.0
  %1625 = vmatpush.msra.mxu0 0.0
  %1626 = vmatpush.msra.mxu0 0.0
  %1627 = vmatpush.msra.mxu0 0.0
  %1628 = vmatpush.msra.mxu0 0.0
  %1629 = vmatpush.msra.mxu0 0.0
  %1630 = vmatpush.msra.mxu0 0.0
  %1631 = vmatpush.msra.mxu0 0.0
  %1632 = vmatpush.msra.mxu0 0.0
  %1633 = vmatpush.msra.mxu0 0.0
  %1634 = vmatpush.msra.mxu0 0.0
  %1635 = vmatpush.msra.mxu0 0.0
  %1636 = vmatpush.msra.mxu0 0.0
  %1637 = vmatpush.msra.mxu0 0.0
  %1638 = vmatpush.msra.mxu0 %v1617
  %1639 = vmatpush.msra.mxu0 %v1615
  %1640 = vmatmul.f32.gmra.mxu0 %v1622
  %v1641 = vpop.f32.mrf.mxu0
  %v1642 = vadd.f32 %v1611, %v1641
  %1643 = vdwg.mxu0
  %v1644 = vmax.f32 %v1642, 0.0
  %v1645 = vld [vmem:[%s3] sm:$0xff]
  %v1646 = vld [vmem:[%s4 + $0x5] sm:$0x1]
  %v1647 = vperm.slane %v1646, 0
  %1649 = vrot.lane.b32.xlu0 %v1645, 8
  %v1650 = vpop.permute.xlu0 %1649
  %v1653 = vsel %vm44, %v1644, 0
  %1655 = vmatpush.msra.mxu0 0.0
  %1656 = vmatpush.msra.mxu0 0.0
  %1657 = vmatpush.msra.mxu0 0.0
  %1658 = vmatpush.msra.mxu0 0.0
  %1659 = vmatpush.msra.mxu0 0.0
  %1660 = vmatpush.msra.mxu0 0.0
  %1661 = vmatpush.msra.mxu0 0.0
  %1662 = vmatpush.msra.mxu0 0.0
  %1663 = vmatpush.msra.mxu0 0.0
  %1664 = vmatpush.msra.mxu0 0.0
  %1665 = vmatpush.msra.mxu0 0.0
  %1666 = vmatpush.msra.mxu0 0.0
  %1667 = vmatpush.msra.mxu0 0.0
  %1668 = vmatpush.msra.mxu0 0.0
  %1669 = vmatpush.msra.mxu0 0.0
  %1670 = vmatpush.msra.mxu0 %v1650
  %1671 = vmatmul.f32.gmra.mxu0 %v1653
  %v1672 = vpop.f32.mrf.mxu0
  %v1673 = vadd.f32 %v1647, %v1672
  %1674 = vdwg.mxu0
  %v1675 = vmax.f32 %v1673, 0.0
  %v1676 = vld [vmem:[%s3] sm:$0xf]
  %v1677 = vld [vmem:[%s4 + $0x6] sm:$0x1]
  %v1678 = vperm.slane %v1677, 0
  %1680 = vrot.lane.b32.xlu0 %v1676, 4
  %v1681 = vpop.permute.xlu0 %1680
  %vm1682 = vcmask 31744
  %v1684 = vsel %vm1682, %v1675, 0
  %v1686 = vsel %vm1305, %v1681, 0
  %1688 = vmatpush.msra.mxu0 0.0
  %1689 = vmatpush.msra.mxu0 0.0
  %1690 = vmatpush.msra.mxu0 0.0
  %1691 = vmatpush.msra.mxu0 0.0
  %1692 = vmatpush.msra.mxu0 0.0
  %1693 = vmatpush.msra.mxu0 0.0
  %1694 = vmatpush.msra.mxu0 0.0
  %1695 = vmatpush.msra.mxu0 0.0
  %1696 = vmatpush.msra.mxu0 0.0
  %1697 = vmatpush.msra.mxu0 0.0
  %1698 = vmatpush.msra.mxu0 0.0
  %1699 = vmatpush.msra.mxu0 0.0
  %1700 = vmatpush.msra.mxu0 0.0
  %1701 = vmatpush.msra.mxu0 0.0
  %1702 = vmatpush.msra.mxu0 0.0
  %1703 = vmatpush.msra.mxu0 %v1686
  %1704 = vmatmul.f32.gmra.mxu0 %v1684
  %v1705 = vpop.f32.mrf.mxu0
  %v1706 = vadd.f32 %v1678, %v1705
  %1707 = vdwg.mxu0
  %v1708 = vtanh.pop %v1706
  %v1709 = vld [vmem:[%s3 + $0x8] sm:$0xf]
  %v1710 = vld [vmem:[%s4 + $0x7] sm:$0x1]
  %v1711 = vperm.slane %v1710, 0
  %v1713 = vsel %vm1682, %v1708, 0
  %v1716 = vsel %vm1305, %v1709, 0
  %1718 = vmatpush.msra.mxu0 0.0
  %1719 = vmatpush.msra.mxu0 0.0
  %1720 = vmatpush.msra.mxu0 0.0
  %1721 = vmatpush.msra.mxu0 0.0
  %1722 = vmatpush.msra.mxu0 0.0
  %1723 = vmatpush.msra.mxu0 0.0
  %1724 = vmatpush.msra.mxu0 0.0
  %1725 = vmatpush.msra.mxu0 0.0
  %1726 = vmatpush.msra.mxu0 0.0
  %1727 = vmatpush.msra.mxu0 0.0
  %1728 = vmatpush.msra.mxu0 0.0
  %1729 = vmatpush.msra.mxu0 0.0
  %1730 = vmatpush.msra.mxu0 0.0
  %1731 = vmatpush.msra.mxu0 0.0
  %1732 = vmatpush.msra.mxu0 0.0
  %1733 = vmatpush.msra.mxu0 %v1716
  %1734 = vmatmul.f32.gmra.mxu0 %v1713
  %v1735 = vpop.f32.mrf.mxu0
  %v1736 = vadd.f32 %v1711, %v1735
  %1737 = vdwg.mxu0
  %v1738 = vxor.u32 %v1736, 2147483648
  %v1739 = vmul.f32 %v1738, 1.442695
  %v1740 = vpow.pop %v1739
  %v1741 = vadd.f32 %v1740, 1.0
  %v1742 = vrcp.pop %v1741
  %v1743 = vmul.f32 %v1741, %v1742
  %v1744 = vsub.f32 1.0, %v1743
  %v1745 = vmul.f32 %v1742, %v1744
  %v1746 = vadd.f32 %v1742, %v1745
  %vm1747 = vweird.f32 %v1741
  %vm1748 = vweird.f32 %v1742
  %vm1749 = vmor %vm1747, %vm1748
  %v1750 = vsel %vm1749, %v1742, %v1746
  %v1751 = vand.u32 2147483647, %v1741
  %vm1752 = vcmp.eq.f32.partialorder %v1751, 8.507059e+37
  %v1753 = vand.u32 %v1741, 2147483648
  %v1754 = vor.u32 1.1754944e-38, %v1753
  %v1755 = vsel %vm1752, %v1754, %v1750
  %v1756 = vmul.f32 1.0, %v1755
  %1758 = vset.pattern.permute.xlu0 0
  %1759 = vperm.xlu0 %1758, %v1756
  %v1760 = vpop.permute.xlu0 %1759
  %1762 = vst [vmem:[%s5] sm:$0xff] %v1760
  // Predicated region
  $region22: #{jarvis_forward.1} parent=0 // pred_check
    _
  $region23: #{jarvis_forward.1} parent=0 // pred_check_branch
    %1764 = sbr.rel (0) target = $region25
  $region24: #{jarvis_forward.1} parent=0 // pred_region
    _
  $region25: #{jarvis_forward.1} parent=0 // pred_fallthru
    _
  // Predicated region
  $region26: #{jarvis_forward.1} parent=0 // pred_check
    _
  $region27: #{jarvis_forward.1} parent=0 // pred_check_branch
    %1766 = sbr.rel (0) target = $region29
  $region28: #{jarvis_forward.1} parent=0 // pred_region
    _
  $region29: #{jarvis_forward.1} parent=0 // pred_fallthru
    _

</llo_original>
